<compile_context>
chip_gen: v7x
topology: tpu7x:2x2x1
jax: 0.10.0
libtpu: 0.0.40
codegen_flags: <defaults>
</compile_context>

<pallas_src>
import functools
import math

import jax
import jax.numpy as jnp
from jax import lax
from jax.experimental import pallas as pl
from jax.experimental.pallas import tpu as pltpu


# --------------------------------------------------------------------------
# Bilinear interpolation matrix (PyTorch F.interpolate, align_corners=False,
# default scale_factor path: src = (dst + 0.5) / scale - 0.5, clamped at 0)
# --------------------------------------------------------------------------
def _bilinear_matrix(in_size, out_size, scale_factor):
    scale = 1.0 / float(scale_factor)
    dst = jnp.arange(out_size, dtype=jnp.float32)
    src = jnp.maximum(scale * (dst + 0.5) - 0.5, 0.0)
    lo = jnp.clip(jnp.floor(src).astype(jnp.int32), 0, in_size - 1)
    hi = jnp.minimum(lo + 1, in_size - 1)
    w_hi = src - lo.astype(jnp.float32)
    w_lo = 1.0 - w_hi
    rows = jnp.arange(out_size)
    m = jnp.zeros((out_size, in_size), jnp.float32)
    m = m.at[rows, lo].add(w_lo)
    m = m.at[rows, hi].add(w_hi)          # lo == hi at the edge -> weights still sum to 1
    return m                               # (out_size, in_size)


# --------------------------------------------------------------------------
# Host-side operator matrices (all tiny; built once per call / weight update)
# --------------------------------------------------------------------------
def _conv_column_matrices(weight, W, pw, dtype):
    """M_dh (W*Cin, W*Cout): row-of-image @ M_dh = that row's conv contribution for
    vertical tap dh, with horizontal taps and horizontal zero-padding folded in."""
    C_out, C_in, KH, KW = weight.shape
    idx = jnp.arange(W)
    mats = []
    for dh in range(KH):
        m = jnp.zeros((W * C_in, W * C_out), jnp.float32)
        for dw in range(KW):
            tap = weight[:, :, dh, dw].astype(jnp.float32).T                     # (Cin, Cout)
            # sel[wi, w] = 1 iff wi == w + dw - pw  (out-of-range taps simply absent)
            sel = (idx[:, None] == idx[None, :] + (dw - pw)).astype(jnp.float32)  # (W, W)
            m = m + jnp.kron(sel, tap)
        mats.append(m)
    return jnp.stack(mats).astype(dtype)                                          # (KH, W*Cin, W*Cout)


def _row_resize_matrices(rh, H, KH, ph, dtype):
    """S_dh (Hout, H): vertical bilinear matrix pre-shifted by vertical tap dh, with
    vertical zero-padding folded in, so that  z = sum_dh S_dh @ (x_rows @ M_dh)."""
    idx = jnp.arange(H)
    mats = []
    for dh in range(KH):
        # shift_mat[h, hi] = 1 iff hi == h + dh - ph
        shift_mat = (idx[None, :] == idx[:, None] + (dh - ph)).astype(jnp.float32)  # (H, H)
        mats.append(rh @ shift_mat)
    return jnp.stack(mats).astype(dtype)                                            # (KH, Hout, H)


def _column_resize_matrix(rw, C_out, dtype):
    """Rw_blk (W*Cout, Wout*Cout) = kron(rw^T, I_Cout): column bilinear resize that keeps
    the (rows, W*Cout) lane-dense layout (no transposes in the kernel)."""
    return jnp.kron(rw.T, jnp.eye(C_out, dtype=jnp.float32)).astype(dtype)


def _vmem_limit_bytes():
    try:
        cap = int(getattr(pltpu.get_tpu_info(), "vmem_capacity_bytes", 64 * 1024 * 1024))
    except Exception:
        cap = 64 * 1024 * 1024
    # half of physical VMEM, capped at 64 MiB (v5e/v6e: 64 MiB, v7x: 32 MiB)
    return int(min(cap // 2, 64 * 1024 * 1024))


# --------------------------------------------------------------------------
# Fused conv3x3 + bilinear-resize kernel (one batch image per grid step)
# --------------------------------------------------------------------------
def _make_kernel(H, W, C_out, H_out, W_out, KH):
    def kernel(x_ref, m_ref, s_ref, rw_ref, o_ref):
        # x_ref : (H, W*Cin)             lane-dense NHWC rows (unpadded)
        # m_ref : (KH, W*Cin, W*Cout)    per-vertical-tap conv matrices
        # s_ref : (KH, Hout, H)          shifted vertical bilinear matrices
        # rw_ref: (W*Cout, Wout*Cout)    kron-expanded horizontal bilinear matrix
        # o_ref : (Hout, Wout*Cout)      lane-dense output rows
        x = x_ref[...]
        cdt = x.dtype

        # conv (3 deep-K MXU matmuls) + vertical resize, all lane-dense, f32 accumulate
        z = jnp.zeros((H_out, W * C_out), jnp.float32)
        for dh in range(KH):
            t = jnp.dot(x, m_ref[dh], preferred_element_type=jnp.float32)      # (H, W*Cout)
            z = z + jnp.dot(s_ref[dh], t.astype(cdt),
                            preferred_element_type=jnp.float32)                # (Hout, W*Cout)

        # horizontal resize: stays in (rows, lanes) layout, no transpose
        out = jnp.dot(z.astype(cdt), rw_ref[...],
                      preferred_element_type=jnp.float32)                      # (Hout, Wout*Cout)
        o_ref[...] = out.astype(o_ref.dtype)                                   # unmasked lane-dense store
    return kernel


def upsample(x, w, scale_factor, compute_dtype=jnp.bfloat16):
    """x: (B, H, W, Cin) NHWC; w: (Cout, Cin, KH, KW) torch conv weight (bias=False).
    compute_dtype: dtype fed to the MXU (accumulation is always f32)."""
    B, H, W, C_in = x.shape
    C_out, _, KH, KW = w.shape
    ph, pw = (KH - 1) // 2, (KW - 1) // 2
    H_out = int(math.floor(H * scale_factor))
    W_out = int(math.floor(W * scale_factor))

    rh = _bilinear_matrix(H, H_out, scale_factor)                  # (Hout, H)
    rw = _bilinear_matrix(W, W_out, scale_factor)                  # (Wout, W)

    m_mats = _conv_column_matrices(w, W, pw, compute_dtype)        # (KH, W*Cin, W*Cout)
    s_mats = _row_resize_matrices(rh, H, KH, ph, compute_dtype)    # (KH, Hout, H)
    rw_blk = _column_resize_matrix(rw, C_out, compute_dtype)       # (W*Cout, Wout*Cout)

    # free (contiguous) reshape to lane-dense rows; no jnp.pad / padded HBM copy anywhere
    x_rows = x.reshape(B, H, W * C_in).astype(compute_dtype)

    out_flat = pl.pallas_call(
        _make_kernel(H, W, C_out, H_out, W_out, KH),
        out_shape=jax.ShapeDtypeStruct((B, H_out, W_out * C_out), x.dtype),
        grid=(B,),
        in_specs=[
            pl.BlockSpec((None, H, W * C_in), lambda b: (b, 0, 0)),
            pl.BlockSpec((KH, W * C_in, W * C_out), lambda b: (0, 0, 0)),
            pl.BlockSpec((KH, H_out, H), lambda b: (0, 0, 0)),
            pl.BlockSpec((W * C_out, W_out * C_out), lambda b: (0, 0)),
        ],
        out_specs=pl.BlockSpec((None, H_out, W_out * C_out), lambda b: (b, 0, 0)),
        compiler_params=pltpu.CompilerParams(
            dimension_semantics=("parallel",),
            vmem_limit_bytes=_vmem_limit_bytes(),
        ),
    )(x_rows, m_mats, s_mats, rw_blk)

    return out_flat.reshape(B, H_out, W_out, C_out)


# --------------------------------------------------------------------------
# Pure-JAX reference (lax.conv + separable bilinear) for correctness check
# --------------------------------------------------------------------------
def upsample_ref(x, w, scale_factor):
    C_out, C_in, KH, KW = w.shape
    ph, pw = (KH - 1) // 2, (KW - 1) // 2
    y = lax.conv_general_dilated(
        x, w, window_strides=(1, 1), padding=((ph, ph), (pw, pw)),
        dimension_numbers=("NHWC", "OIHW", "NHWC"))
    B, H, W, C = y.shape
    H_out = int(math.floor(H * scale_factor))
    W_out = int(math.floor(W * scale_factor))
    rh = _bilinear_matrix(H, H_out, scale_factor)
    rw = _bilinear_matrix(W, W_out, scale_factor)
    y = jnp.einsum("oh,bhwc->bowc", rh, y)
    y = jnp.einsum("pw,bhwc->bhpc", rw, y)
    return y


if __name__ == "__main__":
    B, H, W = 2, 16, 16
    C_in, C_out = 32, 16
    scale = 2.0

    key = jax.random.PRNGKey(0)
    kx, kw = jax.random.split(key)
    x = jax.random.normal(kx, (B, H, W, C_in), jnp.float32)
    w = jax.random.normal(kw, (C_out, C_in, 3, 3), jnp.float32) * (1.0 / math.sqrt(9 * C_in))

    ref = upsample_ref(x, w, scale)

    # f32 end-to-end path: tight numerical check
    fwd_f32 = jax.jit(functools.partial(upsample, scale_factor=scale, compute_dtype=jnp.float32))
    out_f32 = fwd_f32(x, w)
    jax.block_until_ready(out_f32)
    err_f32 = float(jnp.max(jnp.abs(out_f32 - ref)))

    # bf16 MXU inputs / f32 accumulation path (the fast path on v5e/v6e/v7x): looser check
    fwd_bf16 = jax.jit(functools.partial(upsample, scale_factor=scale, compute_dtype=jnp.bfloat16))
    out_bf16 = fwd_bf16(x, w)
    jax.block_until_ready(out_bf16)
    err_bf16 = float(jnp.max(jnp.abs(out_bf16 - ref)))

    assert out_f32.shape == (B, int(H * scale), int(W * scale), C_out), out_f32.shape
    assert out_f32.dtype == jnp.float32
    assert err_f32 < 1e-3, f"f32 max abs err vs reference = {err_f32}"
    assert err_bf16 < 1e-1, f"bf16 max abs err vs reference = {err_bf16}"
    print("KERNEL_OK")
</pallas_src>

<mosaic_0001>
module attributes {stable_mosaic.version = 11 : i64} {
  func.func private @main(%arg0: i32) attributes {dimension_semantics = [#tpu.dimension_semantics<core_parallel>], iteration_bounds = array<i64: 2>, tpu.core_type = #tpu.core_type<sc_scalar_subcore>, window_params = []} {
    return
  }
}

module attributes {stable_mosaic.version = 11 : i64} {
  func.func private @main(%arg0: i32) attributes {dimension_semantics = [#tpu.dimension_semantics<core_parallel>], iteration_bounds = array<i64: 2>, tpu.core_type = #tpu.core_type<sc_scalar_subcore>, window_params = []} {
    return
  }
}

module attributes {stable_mosaic.version = 11 : i64} {
  func.func @kernel(%arg0: i32, %arg1: memref<1x16x512xf32, #tpu.memory_space<vmem>>, %arg2: memref<3x512x256xf32, #tpu.memory_space<vmem>>, %arg3: memref<3x32x16xf32, #tpu.memory_space<vmem>>, %arg4: memref<256x512xf32, #tpu.memory_space<vmem>>, %arg5: memref<1x32x512xf32, #tpu.memory_space<vmem>>) attributes {dimension_semantics = [#tpu.dimension_semantics<parallel>], iteration_bounds = array<i64: 2>, scalar_prefetch = 0 : i64, scratch_operands = 0 : i64, tpu.core_type = #tpu.core_type<tc>, window_params = [{transform_indices = @transform_0, window_bounds = array<i64: 1, 16, 512>}, {pipeline_mode = #tpu.pipeline_mode<synchronous>, transform_indices = @transform_1, window_bounds = array<i64: 3, 512, 256>}, {pipeline_mode = #tpu.pipeline_mode<synchronous>, transform_indices = @transform_2, window_bounds = array<i64: 3, 32, 16>}, {pipeline_mode = #tpu.pipeline_mode<synchronous>, transform_indices = @transform_3, window_bounds = array<i64: 256, 512>}, {transform_indices = @transform_4, window_bounds = array<i64: 1, 32, 512>}]} {
    %c0 = arith.constant 0 : index
    %c0_0 = arith.constant 0 : index
    %c0_1 = arith.constant 0 : index
    %0 = vector.load %arg1[%c0, %c0_0, %c0_1] : memref<1x16x512xf32, #tpu.memory_space<vmem>>, vector<1x16x512xf32>
    %1 = vector.shape_cast %0 : vector<1x16x512xf32> to vector<16x512xf32>
    %cst = arith.constant 0.000000e+00 : f32
    %2 = vector.broadcast %cst : f32 to vector<32x256xf32>
    %c0_2 = arith.constant 0 : index
    %c0_3 = arith.constant 0 : index
    %c0_4 = arith.constant 0 : index
    %3 = vector.load %arg2[%c0_2, %c0_3, %c0_4] : memref<3x512x256xf32, #tpu.memory_space<vmem>>, vector<1x512x256xf32>
    %4 = vector.shape_cast %3 : vector<1x512x256xf32> to vector<512x256xf32>
    %cst_5 = arith.constant dense<0.000000e+00> : vector<16x256xf32>
    %5 = tpu.matmul %1, %4, %cst_5 {dimension_numbers = #tpu.dot_dimension_numbers<[1], [0], [0], [1], [0, 0, 1, 1], [], []>} : vector<16x512xf32>, vector<512x256xf32>, vector<16x256xf32> -> vector<16x256xf32>
    %c0_6 = arith.constant 0 : index
    %c0_7 = arith.constant 0 : index
    %c0_8 = arith.constant 0 : index
    %6 = vector.load %arg3[%c0_6, %c0_7, %c0_8] : memref<3x32x16xf32, #tpu.memory_space<vmem>>, vector<1x32x16xf32>
    %7 = vector.shape_cast %6 : vector<1x32x16xf32> to vector<32x16xf32>
    %cst_9 = arith.constant dense<0.000000e+00> : vector<32x256xf32>
    %8 = tpu.matmul %7, %5, %cst_9 {dimension_numbers = #tpu.dot_dimension_numbers<[1], [0], [0], [1], [0, 0, 1, 1], [], []>} : vector<32x16xf32>, vector<16x256xf32>, vector<32x256xf32> -> vector<32x256xf32>
    %9 = arith.addf %2, %8 : vector<32x256xf32>
    %c1 = arith.constant 1 : index
    %c0_10 = arith.constant 0 : index
    %c0_11 = arith.constant 0 : index
    %10 = vector.load %arg2[%c1, %c0_10, %c0_11] : memref<3x512x256xf32, #tpu.memory_space<vmem>>, vector<1x512x256xf32>
    %11 = vector.shape_cast %10 : vector<1x512x256xf32> to vector<512x256xf32>
    %cst_12 = arith.constant dense<0.000000e+00> : vector<16x256xf32>
    %12 = tpu.matmul %1, %11, %cst_12 {dimension_numbers = #tpu.dot_dimension_numbers<[1], [0], [0], [1], [0, 0, 1, 1], [], []>} : vector<16x512xf32>, vector<512x256xf32>, vector<16x256xf32> -> vector<16x256xf32>
    %c1_13 = arith.constant 1 : index
    %c0_14 = arith.constant 0 : index
    %c0_15 = arith.constant 0 : index
    %13 = vector.load %arg3[%c1_13, %c0_14, %c0_15] : memref<3x32x16xf32, #tpu.memory_space<vmem>>, vector<1x32x16xf32>
    %14 = vector.shape_cast %13 : vector<1x32x16xf32> to vector<32x16xf32>
    %cst_16 = arith.constant dense<0.000000e+00> : vector<32x256xf32>
    %15 = tpu.matmul %14, %12, %cst_16 {dimension_numbers = #tpu.dot_dimension_numbers<[1], [0], [0], [1], [0, 0, 1, 1], [], []>} : vector<32x16xf32>, vector<16x256xf32>, vector<32x256xf32> -> vector<32x256xf32>
    %16 = arith.addf %9, %15 : vector<32x256xf32>
    %c2 = arith.constant 2 : index
    %c0_17 = arith.constant 0 : index
    %c0_18 = arith.constant 0 : index
    %17 = vector.load %arg2[%c2, %c0_17, %c0_18] : memref<3x512x256xf32, #tpu.memory_space<vmem>>, vector<1x512x256xf32>
    %18 = vector.shape_cast %17 : vector<1x512x256xf32> to vector<512x256xf32>
    %cst_19 = arith.constant dense<0.000000e+00> : vector<16x256xf32>
    %19 = tpu.matmul %1, %18, %cst_19 {dimension_numbers = #tpu.dot_dimension_numbers<[1], [0], [0], [1], [0, 0, 1, 1], [], []>} : vector<16x512xf32>, vector<512x256xf32>, vector<16x256xf32> -> vector<16x256xf32>
    %c2_20 = arith.constant 2 : index
    %c0_21 = arith.constant 0 : index
    %c0_22 = arith.constant 0 : index
    %20 = vector.load %arg3[%c2_20, %c0_21, %c0_22] : memref<3x32x16xf32, #tpu.memory_space<vmem>>, vector<1x32x16xf32>
    %21 = vector.shape_cast %20 : vector<1x32x16xf32> to vector<32x16xf32>
    %cst_23 = arith.constant dense<0.000000e+00> : vector<32x256xf32>
    %22 = tpu.matmul %21, %19, %cst_23 {dimension_numbers = #tpu.dot_dimension_numbers<[1], [0], [0], [1], [0, 0, 1, 1], [], []>} : vector<32x16xf32>, vector<16x256xf32>, vector<32x256xf32> -> vector<32x256xf32>
    %23 = arith.addf %16, %22 : vector<32x256xf32>
    %c0_24 = arith.constant 0 : index
    %c0_25 = arith.constant 0 : index
    %24 = vector.load %arg4[%c0_24, %c0_25] : memref<256x512xf32, #tpu.memory_space<vmem>>, vector<256x512xf32>
    %cst_26 = arith.constant dense<0.000000e+00> : vector<32x512xf32>
    %25 = tpu.matmul %23, %24, %cst_26 {dimension_numbers = #tpu.dot_dimension_numbers<[1], [0], [0], [1], [0, 0, 1, 1], [], []>} : vector<32x256xf32>, vector<256x512xf32>, vector<32x512xf32> -> vector<32x512xf32>
    %c0_27 = arith.constant 0 : index
    %c0_28 = arith.constant 0 : index
    %c0_29 = arith.constant 0 : index
    %26 = vector.load %arg5[%c0_27, %c0_28, %c0_29] : memref<1x32x512xf32, #tpu.memory_space<vmem>>, vector<1x32x512xf32>
    %27 = vector.shape_cast %26 : vector<1x32x512xf32> to vector<32x512xf32>
    %28 = vector.shape_cast %25 : vector<32x512xf32> to vector<1x32x512xf32>
    tpu.vector_store %arg5[%c0_27, %c0_28, %c0_29], %28 {strides = array<i32>} : memref<1x32x512xf32, #tpu.memory_space<vmem>>, vector<1x32x512xf32>,
    return
  }
  func.func @transform_0(%arg0: i32) -> (i32, i32, i32) {
    %c0_i32 = arith.constant 0 : i32
    %c0_i32_0 = arith.constant 0 : i32
    %c0_i32_1 = arith.constant 0 : i32
    return %arg0, %c0_i32, %c0_i32_0 : i32, i32, i32
  }
  func.func @transform_1(%arg0: i32) -> (i32, i32, i32) {
    %c0_i32 = arith.constant 0 : i32
    %c0_i32_0 = arith.constant 0 : i32
    %c0_i32_1 = arith.constant 0 : i32
    %c0_i32_2 = arith.constant 0 : i32
    return %c0_i32, %c0_i32_0, %c0_i32_1 : i32, i32, i32
  }
  func.func @transform_2(%arg0: i32) -> (i32, i32, i32) {
    %c0_i32 = arith.constant 0 : i32
    %c0_i32_0 = arith.constant 0 : i32
    %c0_i32_1 = arith.constant 0 : i32
    %c0_i32_2 = arith.constant 0 : i32
    return %c0_i32, %c0_i32_0, %c0_i32_1 : i32, i32, i32
  }
  func.func @transform_3(%arg0: i32) -> (i32, i32) {
    %c0_i32 = arith.constant 0 : i32
    %c0_i32_0 = arith.constant 0 : i32
    %c0_i32_1 = arith.constant 0 : i32
    return %c0_i32, %c0_i32_0 : i32, i32
  }
  func.func @transform_4(%arg0: i32) -> (i32, i32, i32) {
    %c0_i32 = arith.constant 0 : i32
    %c0_i32_0 = arith.constant 0 : i32
    %c0_i32_1 = arith.constant 0 : i32
    return %arg0, %c0_i32, %c0_i32_0 : i32, i32, i32
  }
}

</mosaic_0001>

<llo_original>
// kernel: upsample.1
$region0: #{upsample.1}
  #allocation0 [shape = 'u32[]', space=smem, size = 0x4, offset = 0x4, fixed_abs, tag = 'smem constant byte address 0x4 - core index']
  #allocation1 [shape = 'u32[144,128]{1,0:T(1,128)}', space=vmem, size = 0x12000, scoped, tag = 'internal scratch']
  %s0 = inlined_call_operand.vmem [shape: f32[2,16,512], index: 0, kind: input, shape index: {}]
  %s1 = inlined_call_operand.vmem [shape: f32[3,512,256], index: 1, kind: input, shape index: {}]
  %s2 = inlined_call_operand.vmem [shape: f32[3,32,16], index: 2, kind: input, shape index: {}]
  %s3 = inlined_call_operand.vmem [shape: f32[256,512], index: 3, kind: input, shape index: {}]
  %s4 = inlined_call_operand.vmem [shape: f32[2,32,512], index: 4, kind: output, shape index: {}]
  %s5 = sld [smem:[#allocation0]]
  $region49: #{upsample.1} parent=0
    _
  %s7 = ssub.s32 1, %s5
  %s8 = scalar_select 0, %s7, %s5
  loop: start=0, step=1, limit=4
  $region2: #{upsample.1} parent=0 // loop_pre_header
    _
  $region3: #{upsample.1} parent=0 // loop_header
    %s10 = sphi 0, %s14
    %p11 = scmp.ge.s32.totalorder %s10, 4
    %s20 = sphi 0, %s22
    %s23 = sphi 0, %s20
    %s24 = sphi 0, %s23
    %s40 = sphi 0, %s24
    %s44 = sphi 0, %s44
    %s46 = sphi 0, %s44
    %s47 = sphi 0, %s46
    %s61 = sphi 0, %s47
    %s65 = sphi 0, %s65
    %s67 = sphi 0, %s65
    %s68 = sphi 0, %s67
    %s82 = sphi 0, %s68
    %s86 = sphi 0, %s86
    %s88 = sphi 0, %s86
    %s89 = sphi 0, %s88
    %s103 = sphi 0, %s89
    %s109 = sphi 0, %s111
    %s112 = sphi 0, %s109
    %s113 = sphi 0, %s112
    %s129 = sphi 0, %s113
  $region4: #{upsample.1} parent=0 // loop_header_branch
    %13 = sbr.rel (%p11) target = $region8
  $region5: #{upsample.1} parent=0 // loop_body
    %s15 = ssub.s32 %s10, 1
    %s16 = ssub.s32 %s10, 2
    %s17 = sadd.s32 %s10, 1
    %s18 = ssub.s32 %s10, %s17
    %p19 = scmp.eq.s32.totalorder %s18, 0
    %s21 = sadd.s32 %s20, 1
    %s22 = scalar_select %p19, %s20, %s21
    %p25 = pneg %p19
    %p26 = scmp.eq.s32.totalorder %s10, 1
    %p27 = por %p25, %p26
    %p28 = scmp.ne.s32.totalorder %s20, %s23
    %p29 = scmp.eq.s32.totalorder %s10, 0
    %p30 = por %p28, %p29
    %p31 = scmp.ne.s32.totalorder %s20, %s23
    %p32 = scmp.eq.s32.totalorder %s15, 1
    %p33 = por %p31, %p32
    %p34 = scmp.ne.s32.totalorder %s23, %s24
    %p35 = scmp.eq.s32.totalorder %s15, 0
    %p36 = por %p34, %p35
    %p37 = scmp.ne.s32.totalorder %s23, %s24
    %p38 = scmp.eq.s32.totalorder %s16, 1
    %p39 = por %p37, %p38
    %p41 = scmp.ne.s32.totalorder %s24, %s40
    %p42 = scmp.eq.s32.totalorder %s16, 0
    %p43 = por %p41, %p42
    %s45 = sadd.s32 %s44, 1
    %p48 = scmp.eq.s32.totalorder %s10, 1
    %p49 = scmp.ne.s32.totalorder %s44, %s46
    %p50 = scmp.eq.s32.totalorder %s10, 0
    %p51 = por %p49, %p50
    %p52 = scmp.ne.s32.totalorder %s44, %s46
    %p53 = scmp.eq.s32.totalorder %s15, 1
    %p54 = por %p52, %p53
    %p55 = scmp.ne.s32.totalorder %s46, %s47
    %p56 = scmp.eq.s32.totalorder %s15, 0
    %p57 = por %p55, %p56
    %p58 = scmp.ne.s32.totalorder %s46, %s47
    %p59 = scmp.eq.s32.totalorder %s16, 1
    %p60 = por %p58, %p59
    %p62 = scmp.ne.s32.totalorder %s47, %s61
    %p63 = scmp.eq.s32.totalorder %s16, 0
    %p64 = por %p62, %p63
    %s66 = sadd.s32 %s65, 1
    %p69 = scmp.eq.s32.totalorder %s10, 1
    %p70 = scmp.ne.s32.totalorder %s65, %s67
    %p71 = scmp.eq.s32.totalorder %s10, 0
    %p72 = por %p70, %p71
    %p73 = scmp.ne.s32.totalorder %s65, %s67
    %p74 = scmp.eq.s32.totalorder %s15, 1
    %p75 = por %p73, %p74
    %p76 = scmp.ne.s32.totalorder %s67, %s68
    %p77 = scmp.eq.s32.totalorder %s15, 0
    %p78 = por %p76, %p77
    %p79 = scmp.ne.s32.totalorder %s67, %s68
    %p80 = scmp.eq.s32.totalorder %s16, 1
    %p81 = por %p79, %p80
    %p83 = scmp.ne.s32.totalorder %s68, %s82
    %p84 = scmp.eq.s32.totalorder %s16, 0
    %p85 = por %p83, %p84
    %s87 = sadd.s32 %s86, 1
    %p90 = scmp.eq.s32.totalorder %s10, 1
    %p91 = scmp.ne.s32.totalorder %s86, %s88
    %p92 = scmp.eq.s32.totalorder %s10, 0
    %p93 = por %p91, %p92
    %p94 = scmp.ne.s32.totalorder %s86, %s88
    %p95 = scmp.eq.s32.totalorder %s15, 1
    %p96 = por %p94, %p95
    %p97 = scmp.ne.s32.totalorder %s88, %s89
    %p98 = scmp.eq.s32.totalorder %s15, 0
    %p99 = por %p97, %p98
    %p100 = scmp.ne.s32.totalorder %s88, %s89
    %p101 = scmp.eq.s32.totalorder %s16, 1
    %p102 = por %p100, %p101
    %p104 = scmp.ne.s32.totalorder %s89, %s103
    %p105 = scmp.eq.s32.totalorder %s16, 0
    %p106 = por %p104, %p105
    %s107 = ssub.s32 %s10, %s17
    %p108 = scmp.eq.s32.totalorder %s107, 0
    %s110 = sadd.s32 %s109, 1
    %s111 = scalar_select %p108, %s109, %s110
    %p114 = pneg %p108
    %p115 = scmp.eq.s32.totalorder %s10, 1
    %p116 = por %p114, %p115
    %p117 = scmp.ne.s32.totalorder %s109, %s112
    %p118 = scmp.eq.s32.totalorder %s10, 0
    %p119 = por %p117, %p118
    %p120 = scmp.ne.s32.totalorder %s109, %s112
    %p121 = scmp.eq.s32.totalorder %s15, 1
    %p122 = por %p120, %p121
    %p123 = scmp.ne.s32.totalorder %s112, %s113
    %p124 = scmp.eq.s32.totalorder %s15, 0
    %p125 = por %p123, %p124
    %p126 = scmp.ne.s32.totalorder %s112, %s113
    %p127 = scmp.eq.s32.totalorder %s16, 1
    %p128 = por %p126, %p127
    %p130 = scmp.ne.s32.totalorder %s113, %s129
    %p131 = scmp.eq.s32.totalorder %s16, 0
    %p132 = por %p130, %p131
    %p133 = scmp.le.s32.totalorder 1, %s10
    %p134 = scmp.lt.s32.totalorder %s10, 3
    %p135 = pnand %p133, %p134
    %p136 = pneg %p135
    // Predicated region
    $region9: #{upsample.1} parent=5 // pred_check
      _
    $region10: #{upsample.1} parent=5 // pred_check_branch
      %138 = sbr.rel (%p135) target = $region12
    $region11: #{upsample.1} parent=5 // pred_region
      %s139 = ssub.s32 %s10, 1
      // Predicated region
      $region13: #{upsample.1} parent=11 // pred_check
        %p140 = pneg %p57
      $region14: #{upsample.1} parent=11 // pred_check_branch
        %142 = sbr.rel (%p140) target = $region16
      $region15: #{upsample.1} parent=11 // pred_region
        _
      $region16: #{upsample.1} parent=11 // pred_fallthru
        _
      // Predicated region
      $region17: #{upsample.1} parent=11 // pred_check
        %p143 = pneg %p78
      $region18: #{upsample.1} parent=11 // pred_check_branch
        %145 = sbr.rel (%p143) target = $region20
      $region19: #{upsample.1} parent=11 // pred_region
        _
      $region20: #{upsample.1} parent=11 // pred_fallthru
        _
      // Predicated region
      $region21: #{upsample.1} parent=11 // pred_check
        %p146 = pneg %p99
      $region22: #{upsample.1} parent=11 // pred_check_branch
        %148 = sbr.rel (%p146) target = $region24
      $region23: #{upsample.1} parent=11 // pred_region
        _
      $region24: #{upsample.1} parent=11 // pred_fallthru
        _
    $region12: #{upsample.1} parent=5 // pred_fallthru
      _
    %p149 = scmp.lt.s32.totalorder %s10, 2
    // Predicated region
    $region25: #{upsample.1} parent=5 // pred_check
      %p150 = pneg %p149
    $region26: #{upsample.1} parent=5 // pred_check_branch
      %152 = sbr.rel (%p150) target = $region28
    $region27: #{upsample.1} parent=5 // pred_region
      // Predicated region
      $region29: #{upsample.1} parent=27 // pred_check
        %p153 = pneg %p30
      $region30: #{upsample.1} parent=27 // pred_check_branch
        %155 = sbr.rel (%p153) target = $region32
      $region31: #{upsample.1} parent=27 // pred_region
        %p156 = scmp.lt.s32.totalorder %s10, 1
        %s157 = scalar_select %p156, %s10, 1
        %s158 = smul.addr %s157, 8
        %s159 = smul.addr %s158, 8
        %s160 = scalar_lea.vmem %s0, %s159
      $region32: #{upsample.1} parent=27 // pred_fallthru
        _
    $region28: #{upsample.1} parent=5 // pred_fallthru
      _
    %p161 = scmp.le.s32.totalorder 1, %s10
    %p162 = scmp.lt.s32.totalorder %s10, 3
    %p163 = pnand %p161, %p162
    %p164 = pneg %p163
    // Predicated region
    $region33: #{upsample.1} parent=5 // pred_check
      _
    $region34: #{upsample.1} parent=5 // pred_check_branch
      %166 = sbr.rel (%p163) target = $region36
    $region35: #{upsample.1} parent=5 // pred_region
      %s167 = ssub.s32 %s10, 1
      %p168 = scmp.lt.s32.totalorder %s15, 1
      %s169 = scalar_select %p168, %s15, 1
      %s170 = smul.addr %s169, 8
      %s171 = smul.addr %s170, 8
      %s172 = scalar_lea.vmem %s0, %s171
      %p173 = pneg %p36
      %p174 = pneg %p33
      %p175 = pneg %p57
      %p176 = pneg %p54
      %p177 = pneg %p78
      %p178 = pneg %p75
      %p179 = pneg %p99
      %p180 = pneg %p96
      %p181 = pneg %p125
      %p182 = pneg %p122
      %p183 = scmp.lt.s32.totalorder %s15, 1
      %s184 = scalar_select %p183, %s15, 1
      %s185 = smul.addr %s184, 16
      %s186 = smul.addr %s185, 8
      %s187 = scalar_lea.vmem %s4, %s186
      %p188 = scmp.lt.s32.totalorder %s15, 1
      %s189 = scalar_select %p188, %s15, 1
      %s190 = smul.addr %s189, 8
      %s191 = smul.addr %s190, 8
      %s192 = scalar_lea.vmem %s0, %s191
      %p193 = scmp.lt.s32.totalorder %s15, 1
      %s194 = scalar_select %p193, %s15, 1
      %s195 = smul.addr %s194, 16
      %s196 = smul.addr %s195, 8
      %s197 = scalar_lea.vmem %s4, %s196
      %v198 = vld [vmem:[%s192] sm:$0xff]
      %v199 = vld [vmem:[%s192 + $0x8] sm:$0xff]
      %v200 = vld [vmem:[%s192 + $0x10] sm:$0xff]
      %v201 = vld [vmem:[%s192 + $0x18] sm:$0xff]
      %v202 = vld [vmem:[%s192 + $0x20] sm:$0xff]
      %v203 = vld [vmem:[%s192 + $0x28] sm:$0xff]
      %v204 = vld [vmem:[%s192 + $0x30] sm:$0xff]
      %v205 = vld [vmem:[%s192 + $0x38] sm:$0xff]
      %v206 = vld [vmem:[%s1] sm:$0xff]
      %v207 = vld [vmem:[%s1 + $0x8] sm:$0xff]
      %v208 = vld [vmem:[%s1 + $0x10] sm:$0xff]
      %v209 = vld [vmem:[%s1 + $0x18] sm:$0xff]
      %v210 = vld [vmem:[%s1 + $0x20] sm:$0xff]
      %v211 = vld [vmem:[%s1 + $0x28] sm:$0xff]
      %v212 = vld [vmem:[%s1 + $0x30] sm:$0xff]
      %v213 = vld [vmem:[%s1 + $0x38] sm:$0xff]
      %v214 = vld [vmem:[%s1 + $0x40] sm:$0xff]
      %v215 = vld [vmem:[%s1 + $0x48] sm:$0xff]
      %v216 = vld [vmem:[%s1 + $0x50] sm:$0xff]
      %v217 = vld [vmem:[%s1 + $0x58] sm:$0xff]
      %v218 = vld [vmem:[%s1 + $0x60] sm:$0xff]
      %v219 = vld [vmem:[%s1 + $0x68] sm:$0xff]
      %v220 = vld [vmem:[%s1 + $0x70] sm:$0xff]
      %v221 = vld [vmem:[%s1 + $0x78] sm:$0xff]
      %v222 = vld [vmem:[%s1 + $0x80] sm:$0xff]
      %v223 = vld [vmem:[%s1 + $0x88] sm:$0xff]
      %v224 = vld [vmem:[%s1 + $0x90] sm:$0xff]
      %v225 = vld [vmem:[%s1 + $0x98] sm:$0xff]
      %v226 = vld [vmem:[%s1 + $0xa0] sm:$0xff]
      %v227 = vld [vmem:[%s1 + $0xa8] sm:$0xff]
      %v228 = vld [vmem:[%s1 + $0xb0] sm:$0xff]
      %v229 = vld [vmem:[%s1 + $0xb8] sm:$0xff]
      %v230 = vld [vmem:[%s1 + $0xc0] sm:$0xff]
      %v231 = vld [vmem:[%s1 + $0xc8] sm:$0xff]
      %v232 = vld [vmem:[%s1 + $0xd0] sm:$0xff]
      %v233 = vld [vmem:[%s1 + $0xd8] sm:$0xff]
      %v234 = vld [vmem:[%s1 + $0xe0] sm:$0xff]
      %v235 = vld [vmem:[%s1 + $0xe8] sm:$0xff]
      %v236 = vld [vmem:[%s1 + $0xf0] sm:$0xff]
      %v237 = vld [vmem:[%s1 + $0xf8] sm:$0xff]
      %v238 = vld [vmem:[%s1 + $0x100] sm:$0xff]
      %v239 = vld [vmem:[%s1 + $0x108] sm:$0xff]
      %v240 = vld [vmem:[%s1 + $0x110] sm:$0xff]
      %v241 = vld [vmem:[%s1 + $0x118] sm:$0xff]
      %v242 = vld [vmem:[%s1 + $0x120] sm:$0xff]
      %v243 = vld [vmem:[%s1 + $0x128] sm:$0xff]
      %v244 = vld [vmem:[%s1 + $0x130] sm:$0xff]
      %v245 = vld [vmem:[%s1 + $0x138] sm:$0xff]
      %v246 = vld [vmem:[%s1 + $0x140] sm:$0xff]
      %v247 = vld [vmem:[%s1 + $0x148] sm:$0xff]
      %v248 = vld [vmem:[%s1 + $0x150] sm:$0xff]
      %v249 = vld [vmem:[%s1 + $0x158] sm:$0xff]
      %v250 = vld [vmem:[%s1 + $0x160] sm:$0xff]
      %v251 = vld [vmem:[%s1 + $0x168] sm:$0xff]
      %v252 = vld [vmem:[%s1 + $0x170] sm:$0xff]
      %v253 = vld [vmem:[%s1 + $0x178] sm:$0xff]
      %v254 = vld [vmem:[%s1 + $0x180] sm:$0xff]
      %v255 = vld [vmem:[%s1 + $0x188] sm:$0xff]
      %v256 = vld [vmem:[%s1 + $0x190] sm:$0xff]
      %v257 = vld [vmem:[%s1 + $0x198] sm:$0xff]
      %v258 = vld [vmem:[%s1 + $0x1a0] sm:$0xff]
      %v259 = vld [vmem:[%s1 + $0x1a8] sm:$0xff]
      %v260 = vld [vmem:[%s1 + $0x1b0] sm:$0xff]
      %v261 = vld [vmem:[%s1 + $0x1b8] sm:$0xff]
      %v262 = vld [vmem:[%s1 + $0x1c0] sm:$0xff]
      %v263 = vld [vmem:[%s1 + $0x1c8] sm:$0xff]
      %v264 = vld [vmem:[%s1 + $0x1d0] sm:$0xff]
      %v265 = vld [vmem:[%s1 + $0x1d8] sm:$0xff]
      %v266 = vld [vmem:[%s1 + $0x1e0] sm:$0xff]
      %v267 = vld [vmem:[%s1 + $0x1e8] sm:$0xff]
      %v268 = vld [vmem:[%s1 + $0x1f0] sm:$0xff]
      %v269 = vld [vmem:[%s1 + $0x1f8] sm:$0xff]
      %v270 = vld [vmem:[%s1 + $0x200] sm:$0xff]
      %v271 = vld [vmem:[%s1 + $0x208] sm:$0xff]
      %v272 = vld [vmem:[%s1 + $0x210] sm:$0xff]
      %v273 = vld [vmem:[%s1 + $0x218] sm:$0xff]
      %v274 = vld [vmem:[%s1 + $0x220] sm:$0xff]
      %v275 = vld [vmem:[%s1 + $0x228] sm:$0xff]
      %v276 = vld [vmem:[%s1 + $0x230] sm:$0xff]
      %v277 = vld [vmem:[%s1 + $0x238] sm:$0xff]
      %v278 = vld [vmem:[%s1 + $0x240] sm:$0xff]
      %v279 = vld [vmem:[%s1 + $0x248] sm:$0xff]
      %v280 = vld [vmem:[%s1 + $0x250] sm:$0xff]
      %v281 = vld [vmem:[%s1 + $0x258] sm:$0xff]
      %v282 = vld [vmem:[%s1 + $0x260] sm:$0xff]
      %v283 = vld [vmem:[%s1 + $0x268] sm:$0xff]
      %v284 = vld [vmem:[%s1 + $0x270] sm:$0xff]
      %v285 = vld [vmem:[%s1 + $0x278] sm:$0xff]
      %v286 = vld [vmem:[%s1 + $0x280] sm:$0xff]
      %v287 = vld [vmem:[%s1 + $0x288] sm:$0xff]
      %v288 = vld [vmem:[%s1 + $0x290] sm:$0xff]
      %v289 = vld [vmem:[%s1 + $0x298] sm:$0xff]
      %v290 = vld [vmem:[%s1 + $0x2a0] sm:$0xff]
      %v291 = vld [vmem:[%s1 + $0x2a8] sm:$0xff]
      %v292 = vld [vmem:[%s1 + $0x2b0] sm:$0xff]
      %v293 = vld [vmem:[%s1 + $0x2b8] sm:$0xff]
      %v294 = vld [vmem:[%s1 + $0x2c0] sm:$0xff]
      %v295 = vld [vmem:[%s1 + $0x2c8] sm:$0xff]
      %v296 = vld [vmem:[%s1 + $0x2d0] sm:$0xff]
      %v297 = vld [vmem:[%s1 + $0x2d8] sm:$0xff]
      %v298 = vld [vmem:[%s1 + $0x2e0] sm:$0xff]
      %v299 = vld [vmem:[%s1 + $0x2e8] sm:$0xff]
      %v300 = vld [vmem:[%s1 + $0x2f0] sm:$0xff]
      %v301 = vld [vmem:[%s1 + $0x2f8] sm:$0xff]
      %v302 = vld [vmem:[%s1 + $0x300] sm:$0xff]
      %v303 = vld [vmem:[%s1 + $0x308] sm:$0xff]
      %v304 = vld [vmem:[%s1 + $0x310] sm:$0xff]
      %v305 = vld [vmem:[%s1 + $0x318] sm:$0xff]
      %v306 = vld [vmem:[%s1 + $0x320] sm:$0xff]
      %v307 = vld [vmem:[%s1 + $0x328] sm:$0xff]
      %v308 = vld [vmem:[%s1 + $0x330] sm:$0xff]
      %v309 = vld [vmem:[%s1 + $0x338] sm:$0xff]
      %v310 = vld [vmem:[%s1 + $0x340] sm:$0xff]
      %v311 = vld [vmem:[%s1 + $0x348] sm:$0xff]
      %v312 = vld [vmem:[%s1 + $0x350] sm:$0xff]
      %v313 = vld [vmem:[%s1 + $0x358] sm:$0xff]
      %v314 = vld [vmem:[%s1 + $0x360] sm:$0xff]
      %v315 = vld [vmem:[%s1 + $0x368] sm:$0xff]
      %v316 = vld [vmem:[%s1 + $0x370] sm:$0xff]
      %v317 = vld [vmem:[%s1 + $0x378] sm:$0xff]
      %v318 = vld [vmem:[%s1 + $0x380] sm:$0xff]
      %v319 = vld [vmem:[%s1 + $0x388] sm:$0xff]
      %v320 = vld [vmem:[%s1 + $0x390] sm:$0xff]
      %v321 = vld [vmem:[%s1 + $0x398] sm:$0xff]
      %v322 = vld [vmem:[%s1 + $0x3a0] sm:$0xff]
      %v323 = vld [vmem:[%s1 + $0x3a8] sm:$0xff]
      %v324 = vld [vmem:[%s1 + $0x3b0] sm:$0xff]
      %v325 = vld [vmem:[%s1 + $0x3b8] sm:$0xff]
      %v326 = vld [vmem:[%s1 + $0x3c0] sm:$0xff]
      %v327 = vld [vmem:[%s1 + $0x3c8] sm:$0xff]
      %v328 = vld [vmem:[%s1 + $0x3d0] sm:$0xff]
      %v329 = vld [vmem:[%s1 + $0x3d8] sm:$0xff]
      %v330 = vld [vmem:[%s1 + $0x3e0] sm:$0xff]
      %v331 = vld [vmem:[%s1 + $0x3e8] sm:$0xff]
      %v332 = vld [vmem:[%s1 + $0x3f0] sm:$0xff]
      %v333 = vld [vmem:[%s1 + $0x3f8] sm:$0xff]
      %334 = vmatprep.subr.mxu0 %v207
      %335 = vmatpush1.msra.mxu0 %v206
      %336 = vmatprep.subr.mxu0 %v209
      %337 = vmatpush1.msra.mxu0 %v208
      %338 = vmatprep.subr.mxu0 %v211
      %339 = vmatpush1.msra.mxu0 %v210
      %340 = vmatprep.subr.mxu0 %v213
      %341 = vmatpush1.msra.mxu0 %v212
      %342 = vmatprep.subr.mxu0 %v215
      %343 = vmatpush1.msra.mxu0 %v214
      %344 = vmatprep.subr.mxu0 %v217
      %345 = vmatpush1.msra.mxu0 %v216
      %346 = vmatprep.subr.mxu0 %v219
      %347 = vmatpush1.msra.mxu0 %v218
      %348 = vmatprep.subr.mxu0 %v221
      %349 = vmatpush1.msra.mxu0 %v220
      %350 = vmatprep.subr.mxu0 %v223
      %351 = vmatpush1.msra.mxu0 %v222
      %352 = vmatprep.subr.mxu0 %v225
      %353 = vmatpush1.msra.mxu0 %v224
      %354 = vmatprep.subr.mxu0 %v227
      %355 = vmatpush1.msra.mxu0 %v226
      %356 = vmatprep.subr.mxu0 %v229
      %357 = vmatpush1.msra.mxu0 %v228
      %358 = vmatprep.subr.mxu0 %v231
      %359 = vmatpush1.msra.mxu0 %v230
      %360 = vmatprep.subr.mxu0 %v233
      %361 = vmatpush1.msra.mxu0 %v232
      %362 = vmatprep.subr.mxu0 %v235
      %363 = vmatpush1.msra.mxu0 %v234
      %364 = vmatprep.subr.mxu0 %v237
      %365 = vmatpush1.msra.mxu0 %v236
      %366 = vmatprep.subr.mxu0 %v239
      %367 = vmatpush1.msra.mxu0 %v238
      %368 = vmatprep.subr.mxu0 %v241
      %369 = vmatpush1.msra.mxu0 %v240
      %370 = vmatprep.subr.mxu0 %v243
      %371 = vmatpush1.msra.mxu0 %v242
      %372 = vmatprep.subr.mxu0 %v245
      %373 = vmatpush1.msra.mxu0 %v244
      %374 = vmatprep.subr.mxu0 %v247
      %375 = vmatpush1.msra.mxu0 %v246
      %376 = vmatprep.subr.mxu0 %v249
      %377 = vmatpush1.msra.mxu0 %v248
      %378 = vmatprep.subr.mxu0 %v251
      %379 = vmatpush1.msra.mxu0 %v250
      %380 = vmatprep.subr.mxu0 %v253
      %381 = vmatpush1.msra.mxu0 %v252
      %382 = vmatprep.subr.mxu0 %v255
      %383 = vmatpush1.msra.mxu0 %v254
      %384 = vmatprep.subr.mxu0 %v257
      %385 = vmatpush1.msra.mxu0 %v256
      %386 = vmatprep.subr.mxu0 %v259
      %387 = vmatpush1.msra.mxu0 %v258
      %388 = vmatprep.subr.mxu0 %v261
      %389 = vmatpush1.msra.mxu0 %v260
      %390 = vmatprep.subr.mxu0 %v263
      %391 = vmatpush1.msra.mxu0 %v262
      %392 = vmatprep.subr.mxu0 %v265
      %393 = vmatpush1.msra.mxu0 %v264
      %394 = vmatprep.subr.mxu0 %v267
      %395 = vmatpush1.msra.mxu0 %v266
      %396 = vmatprep.subr.mxu0 %v269
      %397 = vmatpush1.msra.mxu0 %v268
      %398 = vmatprep.mubr.f32.mxu0 %v199
      %399 = vmatmul.mubr.f32.gmra.mrb[0].mxu0 %v198
      %v400 = vpop.f32.mrb[0].mxu0
      %v401 = vadd.f32 0.0, %v400
      %v402 = vpop.f32.mrb[0].mxu0
      %v403 = vadd.f32 0.0, %v402
      %404 = vmatprep.mubr.f32.mxu0 %v203
      %405 = vmatmul.mubr.f32.gmra.mrb[0].mxu0 %v202
      %v406 = vpop.f32.mrb[0].mxu0
      %v407 = vadd.f32 0.0, %v406
      %v408 = vpop.f32.mrb[0].mxu0
      %v409 = vadd.f32 0.0, %v408
      %410 = vdwg.mxu0
      %411 = vmatprep.subr.mxu0 %v271
      %412 = vmatpush1.msra.mxu0 %v270
      %413 = vmatprep.subr.mxu0 %v273
      %414 = vmatpush1.msra.mxu0 %v272
      %415 = vmatprep.subr.mxu0 %v275
      %416 = vmatpush1.msra.mxu0 %v274
      %417 = vmatprep.subr.mxu0 %v277
      %418 = vmatpush1.msra.mxu0 %v276
      %419 = vmatprep.subr.mxu0 %v279
      %420 = vmatpush1.msra.mxu0 %v278
      %421 = vmatprep.subr.mxu0 %v281
      %422 = vmatpush1.msra.mxu0 %v280
      %423 = vmatprep.subr.mxu0 %v283
      %424 = vmatpush1.msra.mxu0 %v282
      %425 = vmatprep.subr.mxu0 %v285
      %426 = vmatpush1.msra.mxu0 %v284
      %427 = vmatprep.subr.mxu0 %v287
      %428 = vmatpush1.msra.mxu0 %v286
      %429 = vmatprep.subr.mxu0 %v289
      %430 = vmatpush1.msra.mxu0 %v288
      %431 = vmatprep.subr.mxu0 %v291
      %432 = vmatpush1.msra.mxu0 %v290
      %433 = vmatprep.subr.mxu0 %v293
      %434 = vmatpush1.msra.mxu0 %v292
      %435 = vmatprep.subr.mxu0 %v295
      %436 = vmatpush1.msra.mxu0 %v294
      %437 = vmatprep.subr.mxu0 %v297
      %438 = vmatpush1.msra.mxu0 %v296
      %439 = vmatprep.subr.mxu0 %v299
      %440 = vmatpush1.msra.mxu0 %v298
      %441 = vmatprep.subr.mxu0 %v301
      %442 = vmatpush1.msra.mxu0 %v300
      %443 = vmatprep.subr.mxu0 %v303
      %444 = vmatpush1.msra.mxu0 %v302
      %445 = vmatprep.subr.mxu0 %v305
      %446 = vmatpush1.msra.mxu0 %v304
      %447 = vmatprep.subr.mxu0 %v307
      %448 = vmatpush1.msra.mxu0 %v306
      %449 = vmatprep.subr.mxu0 %v309
      %450 = vmatpush1.msra.mxu0 %v308
      %451 = vmatprep.subr.mxu0 %v311
      %452 = vmatpush1.msra.mxu0 %v310
      %453 = vmatprep.subr.mxu0 %v313
      %454 = vmatpush1.msra.mxu0 %v312
      %455 = vmatprep.subr.mxu0 %v315
      %456 = vmatpush1.msra.mxu0 %v314
      %457 = vmatprep.subr.mxu0 %v317
      %458 = vmatpush1.msra.mxu0 %v316
      %459 = vmatprep.subr.mxu0 %v319
      %460 = vmatpush1.msra.mxu0 %v318
      %461 = vmatprep.subr.mxu0 %v321
      %462 = vmatpush1.msra.mxu0 %v320
      %463 = vmatprep.subr.mxu0 %v323
      %464 = vmatpush1.msra.mxu0 %v322
      %465 = vmatprep.subr.mxu0 %v325
      %466 = vmatpush1.msra.mxu0 %v324
      %467 = vmatprep.subr.mxu0 %v327
      %468 = vmatpush1.msra.mxu0 %v326
      %469 = vmatprep.subr.mxu0 %v329
      %470 = vmatpush1.msra.mxu0 %v328
      %471 = vmatprep.subr.mxu0 %v331
      %472 = vmatpush1.msra.mxu0 %v330
      %473 = vmatprep.subr.mxu0 %v333
      %474 = vmatpush1.msra.mxu0 %v332
      %475 = vmatprep.mubr.f32.mxu0 %v201
      %476 = vmatmul.mubr.f32.gmra.mrb[0].mxu0 %v200
      %v477 = vpop.f32.mrb[0].mxu0
      %v478 = vadd.f32 %v401, %v477
      %v479 = vpop.f32.mrb[0].mxu0
      %v480 = vadd.f32 %v403, %v479
      %481 = vmatprep.mubr.f32.mxu0 %v205
      %482 = vmatmul.mubr.f32.gmra.mrb[0].mxu0 %v204
      %v483 = vpop.f32.mrb[0].mxu0
      %v484 = vadd.f32 %v407, %v483
      %v485 = vpop.f32.mrb[0].mxu0
      %v486 = vadd.f32 %v409, %v485
      %487 = vdwg.mxu0
      %v488 = vld [vmem:[%s2] sm:$0xff]
      %v489 = vld [vmem:[%s2 + $0x8] sm:$0xff]
      %v490 = vld [vmem:[%s2 + $0x10] sm:$0xff]
      %v491 = vld [vmem:[%s2 + $0x18] sm:$0xff]
      %s492 = scalar_lea.vmem %s1, 1024
      %v493 = vld [vmem:[%s492] sm:$0xff]
      %v494 = vld [vmem:[%s492 + $0x8] sm:$0xff]
      %v495 = vld [vmem:[%s492 + $0x10] sm:$0xff]
      %v496 = vld [vmem:[%s492 + $0x18] sm:$0xff]
      %v497 = vld [vmem:[%s492 + $0x20] sm:$0xff]
      %v498 = vld [vmem:[%s492 + $0x28] sm:$0xff]
      %v499 = vld [vmem:[%s492 + $0x30] sm:$0xff]
      %v500 = vld [vmem:[%s492 + $0x38] sm:$0xff]
      %v501 = vld [vmem:[%s492 + $0x40] sm:$0xff]
      %v502 = vld [vmem:[%s492 + $0x48] sm:$0xff]
      %v503 = vld [vmem:[%s492 + $0x50] sm:$0xff]
      %v504 = vld [vmem:[%s492 + $0x58] sm:$0xff]
      %v505 = vld [vmem:[%s492 + $0x60] sm:$0xff]
      %v506 = vld [vmem:[%s492 + $0x68] sm:$0xff]
      %v507 = vld [vmem:[%s492 + $0x70] sm:$0xff]
      %v508 = vld [vmem:[%s492 + $0x78] sm:$0xff]
      %v509 = vld [vmem:[%s492 + $0x80] sm:$0xff]
      %v510 = vld [vmem:[%s492 + $0x88] sm:$0xff]
      %v511 = vld [vmem:[%s492 + $0x90] sm:$0xff]
      %v512 = vld [vmem:[%s492 + $0x98] sm:$0xff]
      %v513 = vld [vmem:[%s492 + $0xa0] sm:$0xff]
      %v514 = vld [vmem:[%s492 + $0xa8] sm:$0xff]
      %v515 = vld [vmem:[%s492 + $0xb0] sm:$0xff]
      %v516 = vld [vmem:[%s492 + $0xb8] sm:$0xff]
      %v517 = vld [vmem:[%s492 + $0xc0] sm:$0xff]
      %v518 = vld [vmem:[%s492 + $0xc8] sm:$0xff]
      %v519 = vld [vmem:[%s492 + $0xd0] sm:$0xff]
      %v520 = vld [vmem:[%s492 + $0xd8] sm:$0xff]
      %v521 = vld [vmem:[%s492 + $0xe0] sm:$0xff]
      %v522 = vld [vmem:[%s492 + $0xe8] sm:$0xff]
      %v523 = vld [vmem:[%s492 + $0xf0] sm:$0xff]
      %v524 = vld [vmem:[%s492 + $0xf8] sm:$0xff]
      %v525 = vld [vmem:[%s492 + $0x100] sm:$0xff]
      %v526 = vld [vmem:[%s492 + $0x108] sm:$0xff]
      %v527 = vld [vmem:[%s492 + $0x110] sm:$0xff]
      %v528 = vld [vmem:[%s492 + $0x118] sm:$0xff]
      %v529 = vld [vmem:[%s492 + $0x120] sm:$0xff]
      %v530 = vld [vmem:[%s492 + $0x128] sm:$0xff]
      %v531 = vld [vmem:[%s492 + $0x130] sm:$0xff]
      %v532 = vld [vmem:[%s492 + $0x138] sm:$0xff]
      %v533 = vld [vmem:[%s492 + $0x140] sm:$0xff]
      %v534 = vld [vmem:[%s492 + $0x148] sm:$0xff]
      %v535 = vld [vmem:[%s492 + $0x150] sm:$0xff]
      %v536 = vld [vmem:[%s492 + $0x158] sm:$0xff]
      %v537 = vld [vmem:[%s492 + $0x160] sm:$0xff]
      %v538 = vld [vmem:[%s492 + $0x168] sm:$0xff]
      %v539 = vld [vmem:[%s492 + $0x170] sm:$0xff]
      %v540 = vld [vmem:[%s492 + $0x178] sm:$0xff]
      %v541 = vld [vmem:[%s492 + $0x180] sm:$0xff]
      %v542 = vld [vmem:[%s492 + $0x188] sm:$0xff]
      %v543 = vld [vmem:[%s492 + $0x190] sm:$0xff]
      %v544 = vld [vmem:[%s492 + $0x198] sm:$0xff]
      %v545 = vld [vmem:[%s492 + $0x1a0] sm:$0xff]
      %v546 = vld [vmem:[%s492 + $0x1a8] sm:$0xff]
      %v547 = vld [vmem:[%s492 + $0x1b0] sm:$0xff]
      %v548 = vld [vmem:[%s492 + $0x1b8] sm:$0xff]
      %v549 = vld [vmem:[%s492 + $0x1c0] sm:$0xff]
      %v550 = vld [vmem:[%s492 + $0x1c8] sm:$0xff]
      %v551 = vld [vmem:[%s492 + $0x1d0] sm:$0xff]
      %v552 = vld [vmem:[%s492 + $0x1d8] sm:$0xff]
      %v553 = vld [vmem:[%s492 + $0x1e0] sm:$0xff]
      %v554 = vld [vmem:[%s492 + $0x1e8] sm:$0xff]
      %v555 = vld [vmem:[%s492 + $0x1f0] sm:$0xff]
      %v556 = vld [vmem:[%s492 + $0x1f8] sm:$0xff]
      %v557 = vld [vmem:[%s492 + $0x200] sm:$0xff]
      %v558 = vld [vmem:[%s492 + $0x208] sm:$0xff]
      %v559 = vld [vmem:[%s492 + $0x210] sm:$0xff]
      %v560 = vld [vmem:[%s492 + $0x218] sm:$0xff]
      %v561 = vld [vmem:[%s492 + $0x220] sm:$0xff]
      %v562 = vld [vmem:[%s492 + $0x228] sm:$0xff]
      %v563 = vld [vmem:[%s492 + $0x230] sm:$0xff]
      %v564 = vld [vmem:[%s492 + $0x238] sm:$0xff]
      %v565 = vld [vmem:[%s492 + $0x240] sm:$0xff]
      %v566 = vld [vmem:[%s492 + $0x248] sm:$0xff]
      %v567 = vld [vmem:[%s492 + $0x250] sm:$0xff]
      %v568 = vld [vmem:[%s492 + $0x258] sm:$0xff]
      %v569 = vld [vmem:[%s492 + $0x260] sm:$0xff]
      %v570 = vld [vmem:[%s492 + $0x268] sm:$0xff]
      %v571 = vld [vmem:[%s492 + $0x270] sm:$0xff]
      %v572 = vld [vmem:[%s492 + $0x278] sm:$0xff]
      %v573 = vld [vmem:[%s492 + $0x280] sm:$0xff]
      %v574 = vld [vmem:[%s492 + $0x288] sm:$0xff]
      %v575 = vld [vmem:[%s492 + $0x290] sm:$0xff]
      %v576 = vld [vmem:[%s492 + $0x298] sm:$0xff]
      %v577 = vld [vmem:[%s492 + $0x2a0] sm:$0xff]
      %v578 = vld [vmem:[%s492 + $0x2a8] sm:$0xff]
      %v579 = vld [vmem:[%s492 + $0x2b0] sm:$0xff]
      %v580 = vld [vmem:[%s492 + $0x2b8] sm:$0xff]
      %v581 = vld [vmem:[%s492 + $0x2c0] sm:$0xff]
      %v582 = vld [vmem:[%s492 + $0x2c8] sm:$0xff]
      %v583 = vld [vmem:[%s492 + $0x2d0] sm:$0xff]
      %v584 = vld [vmem:[%s492 + $0x2d8] sm:$0xff]
      %v585 = vld [vmem:[%s492 + $0x2e0] sm:$0xff]
      %v586 = vld [vmem:[%s492 + $0x2e8] sm:$0xff]
      %v587 = vld [vmem:[%s492 + $0x2f0] sm:$0xff]
      %v588 = vld [vmem:[%s492 + $0x2f8] sm:$0xff]
      %v589 = vld [vmem:[%s492 + $0x300] sm:$0xff]
      %v590 = vld [vmem:[%s492 + $0x308] sm:$0xff]
      %v591 = vld [vmem:[%s492 + $0x310] sm:$0xff]
      %v592 = vld [vmem:[%s492 + $0x318] sm:$0xff]
      %v593 = vld [vmem:[%s492 + $0x320] sm:$0xff]
      %v594 = vld [vmem:[%s492 + $0x328] sm:$0xff]
      %v595 = vld [vmem:[%s492 + $0x330] sm:$0xff]
      %v596 = vld [vmem:[%s492 + $0x338] sm:$0xff]
      %v597 = vld [vmem:[%s492 + $0x340] sm:$0xff]
      %v598 = vld [vmem:[%s492 + $0x348] sm:$0xff]
      %v599 = vld [vmem:[%s492 + $0x350] sm:$0xff]
      %v600 = vld [vmem:[%s492 + $0x358] sm:$0xff]
      %v601 = vld [vmem:[%s492 + $0x360] sm:$0xff]
      %v602 = vld [vmem:[%s492 + $0x368] sm:$0xff]
      %v603 = vld [vmem:[%s492 + $0x370] sm:$0xff]
      %v604 = vld [vmem:[%s492 + $0x378] sm:$0xff]
      %v605 = vld [vmem:[%s492 + $0x380] sm:$0xff]
      %v606 = vld [vmem:[%s492 + $0x388] sm:$0xff]
      %v607 = vld [vmem:[%s492 + $0x390] sm:$0xff]
      %v608 = vld [vmem:[%s492 + $0x398] sm:$0xff]
      %v609 = vld [vmem:[%s492 + $0x3a0] sm:$0xff]
      %v610 = vld [vmem:[%s492 + $0x3a8] sm:$0xff]
      %v611 = vld [vmem:[%s492 + $0x3b0] sm:$0xff]
      %v612 = vld [vmem:[%s492 + $0x3b8] sm:$0xff]
      %v613 = vld [vmem:[%s492 + $0x3c0] sm:$0xff]
      %v614 = vld [vmem:[%s492 + $0x3c8] sm:$0xff]
      %v615 = vld [vmem:[%s492 + $0x3d0] sm:$0xff]
      %v616 = vld [vmem:[%s492 + $0x3d8] sm:$0xff]
      %v617 = vld [vmem:[%s492 + $0x3e0] sm:$0xff]
      %v618 = vld [vmem:[%s492 + $0x3e8] sm:$0xff]
      %v619 = vld [vmem:[%s492 + $0x3f0] sm:$0xff]
      %v620 = vld [vmem:[%s492 + $0x3f8] sm:$0xff]
      %621 = vmatprep.subr.mxu0 %v494
      %622 = vmatpush1.msra.mxu0 %v493
      %623 = vmatprep.subr.mxu0 %v496
      %624 = vmatpush1.msra.mxu0 %v495
      %625 = vmatprep.subr.mxu0 %v498
      %626 = vmatpush1.msra.mxu0 %v497
      %627 = vmatprep.subr.mxu0 %v500
      %628 = vmatpush1.msra.mxu0 %v499
      %629 = vmatprep.subr.mxu0 %v502
      %630 = vmatpush1.msra.mxu0 %v501
      %631 = vmatprep.subr.mxu0 %v504
      %632 = vmatpush1.msra.mxu0 %v503
      %633 = vmatprep.subr.mxu0 %v506
      %634 = vmatpush1.msra.mxu0 %v505
      %635 = vmatprep.subr.mxu0 %v508
      %636 = vmatpush1.msra.mxu0 %v507
      %637 = vmatprep.subr.mxu0 %v510
      %638 = vmatpush1.msra.mxu0 %v509
      %639 = vmatprep.subr.mxu0 %v512
      %640 = vmatpush1.msra.mxu0 %v511
      %641 = vmatprep.subr.mxu0 %v514
      %642 = vmatpush1.msra.mxu0 %v513
      %643 = vmatprep.subr.mxu0 %v516
      %644 = vmatpush1.msra.mxu0 %v515
      %645 = vmatprep.subr.mxu0 %v518
      %646 = vmatpush1.msra.mxu0 %v517
      %647 = vmatprep.subr.mxu0 %v520
      %648 = vmatpush1.msra.mxu0 %v519
      %649 = vmatprep.subr.mxu0 %v522
      %650 = vmatpush1.msra.mxu0 %v521
      %651 = vmatprep.subr.mxu0 %v524
      %652 = vmatpush1.msra.mxu0 %v523
      %653 = vmatprep.subr.mxu0 %v526
      %654 = vmatpush1.msra.mxu0 %v525
      %655 = vmatprep.subr.mxu0 %v528
      %656 = vmatpush1.msra.mxu0 %v527
      %657 = vmatprep.subr.mxu0 %v530
      %658 = vmatpush1.msra.mxu0 %v529
      %659 = vmatprep.subr.mxu0 %v532
      %660 = vmatpush1.msra.mxu0 %v531
      %661 = vmatprep.subr.mxu0 %v534
      %662 = vmatpush1.msra.mxu0 %v533
      %663 = vmatprep.subr.mxu0 %v536
      %664 = vmatpush1.msra.mxu0 %v535
      %665 = vmatprep.subr.mxu0 %v538
      %666 = vmatpush1.msra.mxu0 %v537
      %667 = vmatprep.subr.mxu0 %v540
      %668 = vmatpush1.msra.mxu0 %v539
      %669 = vmatprep.subr.mxu0 %v542
      %670 = vmatpush1.msra.mxu0 %v541
      %671 = vmatprep.subr.mxu0 %v544
      %672 = vmatpush1.msra.mxu0 %v543
      %673 = vmatprep.subr.mxu0 %v546
      %674 = vmatpush1.msra.mxu0 %v545
      %675 = vmatprep.subr.mxu0 %v548
      %676 = vmatpush1.msra.mxu0 %v547
      %677 = vmatprep.subr.mxu0 %v550
      %678 = vmatpush1.msra.mxu0 %v549
      %679 = vmatprep.subr.mxu0 %v552
      %680 = vmatpush1.msra.mxu0 %v551
      %681 = vmatprep.subr.mxu0 %v554
      %682 = vmatpush1.msra.mxu0 %v553
      %683 = vmatprep.subr.mxu0 %v556
      %684 = vmatpush1.msra.mxu0 %v555
      %685 = vmatprep.mubr.f32.mxu0 %v199
      %686 = vmatmul.mubr.f32.gmra.mrb[0].mxu0 %v198
      %v687 = vpop.f32.mrb[0].mxu0
      %v688 = vadd.f32 0.0, %v687
      %v689 = vpop.f32.mrb[0].mxu0
      %v690 = vadd.f32 0.0, %v689
      %691 = vmatprep.mubr.f32.mxu0 %v203
      %692 = vmatmul.mubr.f32.gmra.mrb[0].mxu0 %v202
      %v693 = vpop.f32.mrb[0].mxu0
      %v694 = vadd.f32 0.0, %v693
      %v695 = vpop.f32.mrb[0].mxu0
      %v696 = vadd.f32 0.0, %v695
      %697 = vdwg.mxu0
      %698 = vmatprep.subr.mxu0 %v558
      %699 = vmatpush1.msra.mxu0 %v557
      %700 = vmatprep.subr.mxu0 %v560
      %701 = vmatpush1.msra.mxu0 %v559
      %702 = vmatprep.subr.mxu0 %v562
      %703 = vmatpush1.msra.mxu0 %v561
      %704 = vmatprep.subr.mxu0 %v564
      %705 = vmatpush1.msra.mxu0 %v563
      %706 = vmatprep.subr.mxu0 %v566
      %707 = vmatpush1.msra.mxu0 %v565
      %708 = vmatprep.subr.mxu0 %v568
      %709 = vmatpush1.msra.mxu0 %v567
      %710 = vmatprep.subr.mxu0 %v570
      %711 = vmatpush1.msra.mxu0 %v569
      %712 = vmatprep.subr.mxu0 %v572
      %713 = vmatpush1.msra.mxu0 %v571
      %714 = vmatprep.subr.mxu0 %v574
      %715 = vmatpush1.msra.mxu0 %v573
      %716 = vmatprep.subr.mxu0 %v576
      %717 = vmatpush1.msra.mxu0 %v575
      %718 = vmatprep.subr.mxu0 %v578
      %719 = vmatpush1.msra.mxu0 %v577
      %720 = vmatprep.subr.mxu0 %v580
      %721 = vmatpush1.msra.mxu0 %v579
      %722 = vmatprep.subr.mxu0 %v582
      %723 = vmatpush1.msra.mxu0 %v581
      %724 = vmatprep.subr.mxu0 %v584
      %725 = vmatpush1.msra.mxu0 %v583
      %726 = vmatprep.subr.mxu0 %v586
      %727 = vmatpush1.msra.mxu0 %v585
      %728 = vmatprep.subr.mxu0 %v588
      %729 = vmatpush1.msra.mxu0 %v587
      %730 = vmatprep.subr.mxu0 %v590
      %731 = vmatpush1.msra.mxu0 %v589
      %732 = vmatprep.subr.mxu0 %v592
      %733 = vmatpush1.msra.mxu0 %v591
      %734 = vmatprep.subr.mxu0 %v594
      %735 = vmatpush1.msra.mxu0 %v593
      %736 = vmatprep.subr.mxu0 %v596
      %737 = vmatpush1.msra.mxu0 %v595
      %738 = vmatprep.subr.mxu0 %v598
      %739 = vmatpush1.msra.mxu0 %v597
      %740 = vmatprep.subr.mxu0 %v600
      %741 = vmatpush1.msra.mxu0 %v599
      %742 = vmatprep.subr.mxu0 %v602
      %743 = vmatpush1.msra.mxu0 %v601
      %744 = vmatprep.subr.mxu0 %v604
      %745 = vmatpush1.msra.mxu0 %v603
      %746 = vmatprep.subr.mxu0 %v606
      %747 = vmatpush1.msra.mxu0 %v605
      %748 = vmatprep.subr.mxu0 %v608
      %749 = vmatpush1.msra.mxu0 %v607
      %750 = vmatprep.subr.mxu0 %v610
      %751 = vmatpush1.msra.mxu0 %v609
      %752 = vmatprep.subr.mxu0 %v612
      %753 = vmatpush1.msra.mxu0 %v611
      %754 = vmatprep.subr.mxu0 %v614
      %755 = vmatpush1.msra.mxu0 %v613
      %756 = vmatprep.subr.mxu0 %v616
      %757 = vmatpush1.msra.mxu0 %v615
      %758 = vmatprep.subr.mxu0 %v618
      %759 = vmatpush1.msra.mxu0 %v617
      %760 = vmatprep.subr.mxu0 %v620
      %761 = vmatpush1.msra.mxu0 %v619
      %762 = vmatprep.mubr.f32.mxu0 %v201
      %763 = vmatmul.mubr.f32.gmra.mrb[0].mxu0 %v200
      %v764 = vpop.f32.mrb[0].mxu0
      %v765 = vadd.f32 %v688, %v764
      %v766 = vpop.f32.mrb[0].mxu0
      %v767 = vadd.f32 %v690, %v766
      %768 = vmatprep.mubr.f32.mxu0 %v205
      %769 = vmatmul.mubr.f32.gmra.mrb[0].mxu0 %v204
      %v770 = vpop.f32.mrb[0].mxu0
      %v771 = vadd.f32 %v694, %v770
      %v772 = vpop.f32.mrb[0].mxu0
      %v773 = vadd.f32 %v696, %v772
      %774 = vdwg.mxu0
      %s775 = scalar_lea.vmem %s2, 32
      %v776 = vld [vmem:[%s775] sm:$0xff]
      %v777 = vld [vmem:[%s775 + $0x8] sm:$0xff]
      %v778 = vld [vmem:[%s775 + $0x10] sm:$0xff]
      %v779 = vld [vmem:[%s775 + $0x18] sm:$0xff]
      %vm780 = vcmask 130048
      %v782 = vsel %vm780, %v776, 0
      %v785 = vsel %vm780, %v777, 0
      %v788 = vsel %vm780, %v778, 0
      %v791 = vsel %vm780, %v779, 0
      %793 = vmatprep.subr.mxu0 %v767
      %794 = vmatpush1.msra.mxu0 %v765
      %795 = vmatprep.subr.mxu0 %v773
      %796 = vmatpush1.msra.mxu0 %v771
      %797 = vmatprep.subr.mxu0 0.0
      %798 = vmatpush1.msra.mxu0 0.0
      %799 = vmatprep.subr.mxu0 0.0
      %800 = vmatpush1.msra.mxu0 0.0
      %801 = vmatprep.subr.mxu0 0.0
      %802 = vmatpush1.msra.mxu0 0.0
      %803 = vmatprep.subr.mxu0 0.0
      %804 = vmatpush1.msra.mxu0 0.0
      %805 = vmatprep.subr.mxu0 0.0
      %806 = vmatpush1.msra.mxu0 0.0
      %807 = vmatprep.subr.mxu0 0.0
      %808 = vmatpush1.msra.mxu0 0.0
      %809 = vmatprep.subr.mxu0 0.0
      %810 = vmatpush1.msra.mxu0 0.0
      %811 = vmatprep.subr.mxu0 0.0
      %812 = vmatpush1.msra.mxu0 0.0
      %813 = vmatprep.subr.mxu0 0.0
      %814 = vmatpush1.msra.mxu0 0.0
      %815 = vmatprep.subr.mxu0 0.0
      %816 = vmatpush1.msra.mxu0 0.0
      %817 = vmatprep.subr.mxu0 0.0
      %818 = vmatpush1.msra.mxu0 0.0
      %819 = vmatprep.subr.mxu0 0.0
      %820 = vmatpush1.msra.mxu0 0.0
      %821 = vmatprep.subr.mxu0 0.0
      %822 = vmatpush1.msra.mxu0 0.0
      %823 = vmatprep.subr.mxu0 0.0
      %824 = vmatpush1.msra.mxu0 0.0
      %825 = vmatprep.subr.mxu0 0.0
      %826 = vmatpush1.msra.mxu0 0.0
      %827 = vmatprep.subr.mxu0 0.0
      %828 = vmatpush1.msra.mxu0 0.0
      %829 = vmatprep.subr.mxu0 0.0
      %830 = vmatpush1.msra.mxu0 0.0
      %831 = vmatprep.subr.mxu0 0.0
      %832 = vmatpush1.msra.mxu0 0.0
      %833 = vmatprep.subr.mxu0 0.0
      %834 = vmatpush1.msra.mxu0 0.0
      %835 = vmatprep.subr.mxu0 0.0
      %836 = vmatpush1.msra.mxu0 0.0
      %837 = vmatprep.subr.mxu0 0.0
      %838 = vmatpush1.msra.mxu0 0.0
      %839 = vmatprep.subr.mxu0 0.0
      %840 = vmatpush1.msra.mxu0 0.0
      %841 = vmatprep.subr.mxu0 0.0
      %842 = vmatpush1.msra.mxu0 0.0
      %843 = vmatprep.subr.mxu0 0.0
      %844 = vmatpush1.msra.mxu0 0.0
      %845 = vmatprep.subr.mxu0 0.0
      %846 = vmatpush1.msra.mxu0 0.0
      %847 = vmatprep.subr.mxu0 0.0
      %848 = vmatpush1.msra.mxu0 0.0
      %849 = vmatprep.subr.mxu0 0.0
      %850 = vmatpush1.msra.mxu0 0.0
      %851 = vmatprep.subr.mxu0 0.0
      %852 = vmatpush1.msra.mxu0 0.0
      %853 = vmatprep.subr.mxu0 0.0
      %854 = vmatpush1.msra.mxu0 0.0
      %855 = vmatprep.subr.mxu0 0.0
      %856 = vmatpush1.msra.mxu0 0.0
      %857 = vmatprep.mubr.f32.mxu0 0.0
      %858 = vmatmul.mubr.f32.gmra.mrb[0].mxu0 %v782
      %v859 = vpop.f32.mrb[0].mxu0
      %v860 = vadd.f32 0.0, %v859
      %v861 = vpop.f32.mrb[0].mxu0
      %v862 = vadd.f32 0.0, %v861
      %863 = vmatprep.mubr.f32.mxu0 0.0
      %864 = vmatmul.mubr.f32.gmra.mrb[0].mxu0 %v785
      %v865 = vpop.f32.mrb[0].mxu0
      %v866 = vadd.f32 0.0, %v865
      %v867 = vpop.f32.mrb[0].mxu0
      %v868 = vadd.f32 0.0, %v867
      %869 = vmatprep.mubr.f32.mxu0 0.0
      %870 = vmatmul.mubr.f32.gmra.mrb[0].mxu0 %v788
      %v871 = vpop.f32.mrb[0].mxu0
      %v872 = vadd.f32 0.0, %v871
      %v873 = vpop.f32.mrb[0].mxu0
      %v874 = vadd.f32 0.0, %v873
      %875 = vmatprep.mubr.f32.mxu0 0.0
      %876 = vmatmul.mubr.f32.gmra.mrb[0].mxu0 %v791
      %v877 = vpop.f32.mrb[0].mxu0
      %v878 = vadd.f32 0.0, %v877
      %v879 = vpop.f32.mrb[0].mxu0
      %v880 = vadd.f32 0.0, %v879
      %881 = vdwg.mxu0
      %v883 = vsel %vm780, %v488, 0
      %v886 = vsel %vm780, %v489, 0
      %v889 = vsel %vm780, %v490, 0
      %v892 = vsel %vm780, %v491, 0
      %894 = vmatprep.subr.mxu0 %v480
      %895 = vmatpush1.msra.mxu0 %v478
      %896 = vmatprep.subr.mxu0 %v486
      %897 = vmatpush1.msra.mxu0 %v484
      %898 = vmatprep.subr.mxu0 0.0
      %899 = vmatpush1.msra.mxu0 0.0
      %900 = vmatprep.subr.mxu0 0.0
      %901 = vmatpush1.msra.mxu0 0.0
      %902 = vmatprep.subr.mxu0 0.0
      %903 = vmatpush1.msra.mxu0 0.0
      %904 = vmatprep.subr.mxu0 0.0
      %905 = vmatpush1.msra.mxu0 0.0
      %906 = vmatprep.subr.mxu0 0.0
      %907 = vmatpush1.msra.mxu0 0.0
      %908 = vmatprep.subr.mxu0 0.0
      %909 = vmatpush1.msra.mxu0 0.0
      %910 = vmatprep.subr.mxu0 0.0
      %911 = vmatpush1.msra.mxu0 0.0
      %912 = vmatprep.subr.mxu0 0.0
      %913 = vmatpush1.msra.mxu0 0.0
      %914 = vmatprep.subr.mxu0 0.0
      %915 = vmatpush1.msra.mxu0 0.0
      %916 = vmatprep.subr.mxu0 0.0
      %917 = vmatpush1.msra.mxu0 0.0
      %918 = vmatprep.subr.mxu0 0.0
      %919 = vmatpush1.msra.mxu0 0.0
      %920 = vmatprep.subr.mxu0 0.0
      %921 = vmatpush1.msra.mxu0 0.0
      %922 = vmatprep.subr.mxu0 0.0
      %923 = vmatpush1.msra.mxu0 0.0
      %924 = vmatprep.subr.mxu0 0.0
      %925 = vmatpush1.msra.mxu0 0.0
      %926 = vmatprep.subr.mxu0 0.0
      %927 = vmatpush1.msra.mxu0 0.0
      %928 = vmatprep.subr.mxu0 0.0
      %929 = vmatpush1.msra.mxu0 0.0
      %930 = vmatprep.subr.mxu0 0.0
      %931 = vmatpush1.msra.mxu0 0.0
      %932 = vmatprep.subr.mxu0 0.0
      %933 = vmatpush1.msra.mxu0 0.0
      %934 = vmatprep.subr.mxu0 0.0
      %935 = vmatpush1.msra.mxu0 0.0
      %936 = vmatprep.subr.mxu0 0.0
      %937 = vmatpush1.msra.mxu0 0.0
      %938 = vmatprep.subr.mxu0 0.0
      %939 = vmatpush1.msra.mxu0 0.0
      %940 = vmatprep.subr.mxu0 0.0
      %941 = vmatpush1.msra.mxu0 0.0
      %942 = vmatprep.subr.mxu0 0.0
      %943 = vmatpush1.msra.mxu0 0.0
      %944 = vmatprep.subr.mxu0 0.0
      %945 = vmatpush1.msra.mxu0 0.0
      %946 = vmatprep.subr.mxu0 0.0
      %947 = vmatpush1.msra.mxu0 0.0
      %948 = vmatprep.subr.mxu0 0.0
      %949 = vmatpush1.msra.mxu0 0.0
      %950 = vmatprep.subr.mxu0 0.0
      %951 = vmatpush1.msra.mxu0 0.0
      %952 = vmatprep.subr.mxu0 0.0
      %953 = vmatpush1.msra.mxu0 0.0
      %954 = vmatprep.subr.mxu0 0.0
      %955 = vmatpush1.msra.mxu0 0.0
      %956 = vmatprep.subr.mxu0 0.0
      %957 = vmatpush1.msra.mxu0 0.0
      %958 = vmatprep.mubr.f32.mxu0 0.0
      %959 = vmatmul.mubr.f32.gmra.mrb[0].mxu0 %v883
      %v960 = vpop.f32.mrb[0].mxu0
      %v961 = vadd.f32 %v860, %v960
      %v962 = vpop.f32.mrb[0].mxu0
      %v963 = vadd.f32 %v862, %v962
      %964 = vmatprep.mubr.f32.mxu0 0.0
      %965 = vmatmul.mubr.f32.gmra.mrb[0].mxu0 %v886
      %v966 = vpop.f32.mrb[0].mxu0
      %v967 = vadd.f32 %v866, %v966
      %v968 = vpop.f32.mrb[0].mxu0
      %v969 = vadd.f32 %v868, %v968
      %970 = vmatprep.mubr.f32.mxu0 0.0
      %971 = vmatmul.mubr.f32.gmra.mrb[0].mxu0 %v889
      %v972 = vpop.f32.mrb[0].mxu0
      %v973 = vadd.f32 %v872, %v972
      %v974 = vpop.f32.mrb[0].mxu0
      %v975 = vadd.f32 %v874, %v974
      %976 = vmatprep.mubr.f32.mxu0 0.0
      %977 = vmatmul.mubr.f32.gmra.mrb[0].mxu0 %v892
      %v978 = vpop.f32.mrb[0].mxu0
      %v979 = vadd.f32 %v878, %v978
      %v980 = vpop.f32.mrb[0].mxu0
      %v981 = vadd.f32 %v880, %v980
      %982 = vdwg.mxu0
      %s983 = scalar_lea.vmem %s1, 2048
      %v984 = vld [vmem:[%s983] sm:$0xff]
      %v985 = vld [vmem:[%s983 + $0x8] sm:$0xff]
      %v986 = vld [vmem:[%s983 + $0x10] sm:$0xff]
      %v987 = vld [vmem:[%s983 + $0x18] sm:$0xff]
      %v988 = vld [vmem:[%s983 + $0x20] sm:$0xff]
      %v989 = vld [vmem:[%s983 + $0x28] sm:$0xff]
      %v990 = vld [vmem:[%s983 + $0x30] sm:$0xff]
      %v991 = vld [vmem:[%s983 + $0x38] sm:$0xff]
      %v992 = vld [vmem:[%s983 + $0x40] sm:$0xff]
      %v993 = vld [vmem:[%s983 + $0x48] sm:$0xff]
      %v994 = vld [vmem:[%s983 + $0x50] sm:$0xff]
      %v995 = vld [vmem:[%s983 + $0x58] sm:$0xff]
      %v996 = vld [vmem:[%s983 + $0x60] sm:$0xff]
      %v997 = vld [vmem:[%s983 + $0x68] sm:$0xff]
      %v998 = vld [vmem:[%s983 + $0x70] sm:$0xff]
      %v999 = vld [vmem:[%s983 + $0x78] sm:$0xff]
      %v1000 = vld [vmem:[%s983 + $0x80] sm:$0xff]
      %v1001 = vld [vmem:[%s983 + $0x88] sm:$0xff]
      %v1002 = vld [vmem:[%s983 + $0x90] sm:$0xff]
      %v1003 = vld [vmem:[%s983 + $0x98] sm:$0xff]
      %v1004 = vld [vmem:[%s983 + $0xa0] sm:$0xff]
      %v1005 = vld [vmem:[%s983 + $0xa8] sm:$0xff]
      %v1006 = vld [vmem:[%s983 + $0xb0] sm:$0xff]
      %v1007 = vld [vmem:[%s983 + $0xb8] sm:$0xff]
      %v1008 = vld [vmem:[%s983 + $0xc0] sm:$0xff]
      %v1009 = vld [vmem:[%s983 + $0xc8] sm:$0xff]
      %v1010 = vld [vmem:[%s983 + $0xd0] sm:$0xff]
      %v1011 = vld [vmem:[%s983 + $0xd8] sm:$0xff]
      %v1012 = vld [vmem:[%s983 + $0xe0] sm:$0xff]
      %v1013 = vld [vmem:[%s983 + $0xe8] sm:$0xff]
      %v1014 = vld [vmem:[%s983 + $0xf0] sm:$0xff]
      %v1015 = vld [vmem:[%s983 + $0xf8] sm:$0xff]
      %v1016 = vld [vmem:[%s983 + $0x100] sm:$0xff]
      %v1017 = vld [vmem:[%s983 + $0x108] sm:$0xff]
      %v1018 = vld [vmem:[%s983 + $0x110] sm:$0xff]
      %v1019 = vld [vmem:[%s983 + $0x118] sm:$0xff]
      %v1020 = vld [vmem:[%s983 + $0x120] sm:$0xff]
      %v1021 = vld [vmem:[%s983 + $0x128] sm:$0xff]
      %v1022 = vld [vmem:[%s983 + $0x130] sm:$0xff]
      %v1023 = vld [vmem:[%s983 + $0x138] sm:$0xff]
      %v1024 = vld [vmem:[%s983 + $0x140] sm:$0xff]
      %v1025 = vld [vmem:[%s983 + $0x148] sm:$0xff]
      %v1026 = vld [vmem:[%s983 + $0x150] sm:$0xff]
      %v1027 = vld [vmem:[%s983 + $0x158] sm:$0xff]
      %v1028 = vld [vmem:[%s983 + $0x160] sm:$0xff]
      %v1029 = vld [vmem:[%s983 + $0x168] sm:$0xff]
      %v1030 = vld [vmem:[%s983 + $0x170] sm:$0xff]
      %v1031 = vld [vmem:[%s983 + $0x178] sm:$0xff]
      %v1032 = vld [vmem:[%s983 + $0x180] sm:$0xff]
      %v1033 = vld [vmem:[%s983 + $0x188] sm:$0xff]
      %v1034 = vld [vmem:[%s983 + $0x190] sm:$0xff]
      %v1035 = vld [vmem:[%s983 + $0x198] sm:$0xff]
      %v1036 = vld [vmem:[%s983 + $0x1a0] sm:$0xff]
      %v1037 = vld [vmem:[%s983 + $0x1a8] sm:$0xff]
      %v1038 = vld [vmem:[%s983 + $0x1b0] sm:$0xff]
      %v1039 = vld [vmem:[%s983 + $0x1b8] sm:$0xff]
      %v1040 = vld [vmem:[%s983 + $0x1c0] sm:$0xff]
      %v1041 = vld [vmem:[%s983 + $0x1c8] sm:$0xff]
      %v1042 = vld [vmem:[%s983 + $0x1d0] sm:$0xff]
      %v1043 = vld [vmem:[%s983 + $0x1d8] sm:$0xff]
      %v1044 = vld [vmem:[%s983 + $0x1e0] sm:$0xff]
      %v1045 = vld [vmem:[%s983 + $0x1e8] sm:$0xff]
      %v1046 = vld [vmem:[%s983 + $0x1f0] sm:$0xff]
      %v1047 = vld [vmem:[%s983 + $0x1f8] sm:$0xff]
      %v1048 = vld [vmem:[%s983 + $0x200] sm:$0xff]
      %v1049 = vld [vmem:[%s983 + $0x208] sm:$0xff]
      %v1050 = vld [vmem:[%s983 + $0x210] sm:$0xff]
      %v1051 = vld [vmem:[%s983 + $0x218] sm:$0xff]
      %v1052 = vld [vmem:[%s983 + $0x220] sm:$0xff]
      %v1053 = vld [vmem:[%s983 + $0x228] sm:$0xff]
      %v1054 = vld [vmem:[%s983 + $0x230] sm:$0xff]
      %v1055 = vld [vmem:[%s983 + $0x238] sm:$0xff]
      %v1056 = vld [vmem:[%s983 + $0x240] sm:$0xff]
      %v1057 = vld [vmem:[%s983 + $0x248] sm:$0xff]
      %v1058 = vld [vmem:[%s983 + $0x250] sm:$0xff]
      %v1059 = vld [vmem:[%s983 + $0x258] sm:$0xff]
      %v1060 = vld [vmem:[%s983 + $0x260] sm:$0xff]
      %v1061 = vld [vmem:[%s983 + $0x268] sm:$0xff]
      %v1062 = vld [vmem:[%s983 + $0x270] sm:$0xff]
      %v1063 = vld [vmem:[%s983 + $0x278] sm:$0xff]
      %v1064 = vld [vmem:[%s983 + $0x280] sm:$0xff]
      %v1065 = vld [vmem:[%s983 + $0x288] sm:$0xff]
      %v1066 = vld [vmem:[%s983 + $0x290] sm:$0xff]
      %v1067 = vld [vmem:[%s983 + $0x298] sm:$0xff]
      %v1068 = vld [vmem:[%s983 + $0x2a0] sm:$0xff]
      %v1069 = vld [vmem:[%s983 + $0x2a8] sm:$0xff]
      %v1070 = vld [vmem:[%s983 + $0x2b0] sm:$0xff]
      %v1071 = vld [vmem:[%s983 + $0x2b8] sm:$0xff]
      %v1072 = vld [vmem:[%s983 + $0x2c0] sm:$0xff]
      %v1073 = vld [vmem:[%s983 + $0x2c8] sm:$0xff]
      %v1074 = vld [vmem:[%s983 + $0x2d0] sm:$0xff]
      %v1075 = vld [vmem:[%s983 + $0x2d8] sm:$0xff]
      %v1076 = vld [vmem:[%s983 + $0x2e0] sm:$0xff]
      %v1077 = vld [vmem:[%s983 + $0x2e8] sm:$0xff]
      %v1078 = vld [vmem:[%s983 + $0x2f0] sm:$0xff]
      %v1079 = vld [vmem:[%s983 + $0x2f8] sm:$0xff]
      %v1080 = vld [vmem:[%s983 + $0x300] sm:$0xff]
      %v1081 = vld [vmem:[%s983 + $0x308] sm:$0xff]
      %v1082 = vld [vmem:[%s983 + $0x310] sm:$0xff]
      %v1083 = vld [vmem:[%s983 + $0x318] sm:$0xff]
      %v1084 = vld [vmem:[%s983 + $0x320] sm:$0xff]
      %v1085 = vld [vmem:[%s983 + $0x328] sm:$0xff]
      %v1086 = vld [vmem:[%s983 + $0x330] sm:$0xff]
      %v1087 = vld [vmem:[%s983 + $0x338] sm:$0xff]
      %v1088 = vld [vmem:[%s983 + $0x340] sm:$0xff]
      %v1089 = vld [vmem:[%s983 + $0x348] sm:$0xff]
      %v1090 = vld [vmem:[%s983 + $0x350] sm:$0xff]
      %v1091 = vld [vmem:[%s983 + $0x358] sm:$0xff]
      %v1092 = vld [vmem:[%s983 + $0x360] sm:$0xff]
      %v1093 = vld [vmem:[%s983 + $0x368] sm:$0xff]
      %v1094 = vld [vmem:[%s983 + $0x370] sm:$0xff]
      %v1095 = vld [vmem:[%s983 + $0x378] sm:$0xff]
      %v1096 = vld [vmem:[%s983 + $0x380] sm:$0xff]
      %v1097 = vld [vmem:[%s983 + $0x388] sm:$0xff]
      %v1098 = vld [vmem:[%s983 + $0x390] sm:$0xff]
      %v1099 = vld [vmem:[%s983 + $0x398] sm:$0xff]
      %v1100 = vld [vmem:[%s983 + $0x3a0] sm:$0xff]
      %v1101 = vld [vmem:[%s983 + $0x3a8] sm:$0xff]
      %v1102 = vld [vmem:[%s983 + $0x3b0] sm:$0xff]
      %v1103 = vld [vmem:[%s983 + $0x3b8] sm:$0xff]
      %v1104 = vld [vmem:[%s983 + $0x3c0] sm:$0xff]
      %v1105 = vld [vmem:[%s983 + $0x3c8] sm:$0xff]
      %v1106 = vld [vmem:[%s983 + $0x3d0] sm:$0xff]
      %v1107 = vld [vmem:[%s983 + $0x3d8] sm:$0xff]
      %v1108 = vld [vmem:[%s983 + $0x3e0] sm:$0xff]
      %v1109 = vld [vmem:[%s983 + $0x3e8] sm:$0xff]
      %v1110 = vld [vmem:[%s983 + $0x3f0] sm:$0xff]
      %v1111 = vld [vmem:[%s983 + $0x3f8] sm:$0xff]
      %1112 = vmatprep.subr.mxu0 %v985
      %1113 = vmatpush1.msra.mxu0 %v984
      %1114 = vmatprep.subr.mxu0 %v987
      %1115 = vmatpush1.msra.mxu0 %v986
      %1116 = vmatprep.subr.mxu0 %v989
      %1117 = vmatpush1.msra.mxu0 %v988
      %1118 = vmatprep.subr.mxu0 %v991
      %1119 = vmatpush1.msra.mxu0 %v990
      %1120 = vmatprep.subr.mxu0 %v993
      %1121 = vmatpush1.msra.mxu0 %v992
      %1122 = vmatprep.subr.mxu0 %v995
      %1123 = vmatpush1.msra.mxu0 %v994
      %1124 = vmatprep.subr.mxu0 %v997
      %1125 = vmatpush1.msra.mxu0 %v996
      %1126 = vmatprep.subr.mxu0 %v999
      %1127 = vmatpush1.msra.mxu0 %v998
      %1128 = vmatprep.subr.mxu0 %v1001
      %1129 = vmatpush1.msra.mxu0 %v1000
      %1130 = vmatprep.subr.mxu0 %v1003
      %1131 = vmatpush1.msra.mxu0 %v1002
      %1132 = vmatprep.subr.mxu0 %v1005
      %1133 = vmatpush1.msra.mxu0 %v1004
      %1134 = vmatprep.subr.mxu0 %v1007
      %1135 = vmatpush1.msra.mxu0 %v1006
      %1136 = vmatprep.subr.mxu0 %v1009
      %1137 = vmatpush1.msra.mxu0 %v1008
      %1138 = vmatprep.subr.mxu0 %v1011
      %1139 = vmatpush1.msra.mxu0 %v1010
      %1140 = vmatprep.subr.mxu0 %v1013
      %1141 = vmatpush1.msra.mxu0 %v1012
      %1142 = vmatprep.subr.mxu0 %v1015
      %1143 = vmatpush1.msra.mxu0 %v1014
      %1144 = vmatprep.subr.mxu0 %v1017
      %1145 = vmatpush1.msra.mxu0 %v1016
      %1146 = vmatprep.subr.mxu0 %v1019
      %1147 = vmatpush1.msra.mxu0 %v1018
      %1148 = vmatprep.subr.mxu0 %v1021
      %1149 = vmatpush1.msra.mxu0 %v1020
      %1150 = vmatprep.subr.mxu0 %v1023
      %1151 = vmatpush1.msra.mxu0 %v1022
      %1152 = vmatprep.subr.mxu0 %v1025
      %1153 = vmatpush1.msra.mxu0 %v1024
      %1154 = vmatprep.subr.mxu0 %v1027
      %1155 = vmatpush1.msra.mxu0 %v1026
      %1156 = vmatprep.subr.mxu0 %v1029
      %1157 = vmatpush1.msra.mxu0 %v1028
      %1158 = vmatprep.subr.mxu0 %v1031
      %1159 = vmatpush1.msra.mxu0 %v1030
      %1160 = vmatprep.subr.mxu0 %v1033
      %1161 = vmatpush1.msra.mxu0 %v1032
      %1162 = vmatprep.subr.mxu0 %v1035
      %1163 = vmatpush1.msra.mxu0 %v1034
      %1164 = vmatprep.subr.mxu0 %v1037
      %1165 = vmatpush1.msra.mxu0 %v1036
      %1166 = vmatprep.subr.mxu0 %v1039
      %1167 = vmatpush1.msra.mxu0 %v1038
      %1168 = vmatprep.subr.mxu0 %v1041
      %1169 = vmatpush1.msra.mxu0 %v1040
      %1170 = vmatprep.subr.mxu0 %v1043
      %1171 = vmatpush1.msra.mxu0 %v1042
      %1172 = vmatprep.subr.mxu0 %v1045
      %1173 = vmatpush1.msra.mxu0 %v1044
      %1174 = vmatprep.subr.mxu0 %v1047
      %1175 = vmatpush1.msra.mxu0 %v1046
      %1176 = vmatprep.mubr.f32.mxu0 %v199
      %1177 = vmatmul.mubr.f32.gmra.mrb[0].mxu0 %v198
      %v1178 = vpop.f32.mrb[0].mxu0
      %v1179 = vadd.f32 0.0, %v1178
      %v1180 = vpop.f32.mrb[0].mxu0
      %v1181 = vadd.f32 0.0, %v1180
      %1182 = vmatprep.mubr.f32.mxu0 %v203
      %1183 = vmatmul.mubr.f32.gmra.mrb[0].mxu0 %v202
      %v1184 = vpop.f32.mrb[0].mxu0
      %v1185 = vadd.f32 0.0, %v1184
      %v1186 = vpop.f32.mrb[0].mxu0
      %v1187 = vadd.f32 0.0, %v1186
      %1188 = vdwg.mxu0
      %1189 = vmatprep.subr.mxu0 %v1049
      %1190 = vmatpush1.msra.mxu0 %v1048
      %1191 = vmatprep.subr.mxu0 %v1051
      %1192 = vmatpush1.msra.mxu0 %v1050
      %1193 = vmatprep.subr.mxu0 %v1053
      %1194 = vmatpush1.msra.mxu0 %v1052
      %1195 = vmatprep.subr.mxu0 %v1055
      %1196 = vmatpush1.msra.mxu0 %v1054
      %1197 = vmatprep.subr.mxu0 %v1057
      %1198 = vmatpush1.msra.mxu0 %v1056
      %1199 = vmatprep.subr.mxu0 %v1059
      %1200 = vmatpush1.msra.mxu0 %v1058
      %1201 = vmatprep.subr.mxu0 %v1061
      %1202 = vmatpush1.msra.mxu0 %v1060
      %1203 = vmatprep.subr.mxu0 %v1063
      %1204 = vmatpush1.msra.mxu0 %v1062
      %1205 = vmatprep.subr.mxu0 %v1065
      %1206 = vmatpush1.msra.mxu0 %v1064
      %1207 = vmatprep.subr.mxu0 %v1067
      %1208 = vmatpush1.msra.mxu0 %v1066
      %1209 = vmatprep.subr.mxu0 %v1069
      %1210 = vmatpush1.msra.mxu0 %v1068
      %1211 = vmatprep.subr.mxu0 %v1071
      %1212 = vmatpush1.msra.mxu0 %v1070
      %1213 = vmatprep.subr.mxu0 %v1073
      %1214 = vmatpush1.msra.mxu0 %v1072
      %1215 = vmatprep.subr.mxu0 %v1075
      %1216 = vmatpush1.msra.mxu0 %v1074
      %1217 = vmatprep.subr.mxu0 %v1077
      %1218 = vmatpush1.msra.mxu0 %v1076
      %1219 = vmatprep.subr.mxu0 %v1079
      %1220 = vmatpush1.msra.mxu0 %v1078
      %1221 = vmatprep.subr.mxu0 %v1081
      %1222 = vmatpush1.msra.mxu0 %v1080
      %1223 = vmatprep.subr.mxu0 %v1083
      %1224 = vmatpush1.msra.mxu0 %v1082
      %1225 = vmatprep.subr.mxu0 %v1085
      %1226 = vmatpush1.msra.mxu0 %v1084
      %1227 = vmatprep.subr.mxu0 %v1087
      %1228 = vmatpush1.msra.mxu0 %v1086
      %1229 = vmatprep.subr.mxu0 %v1089
      %1230 = vmatpush1.msra.mxu0 %v1088
      %1231 = vmatprep.subr.mxu0 %v1091
      %1232 = vmatpush1.msra.mxu0 %v1090
      %1233 = vmatprep.subr.mxu0 %v1093
      %1234 = vmatpush1.msra.mxu0 %v1092
      %1235 = vmatprep.subr.mxu0 %v1095
      %1236 = vmatpush1.msra.mxu0 %v1094
      %1237 = vmatprep.subr.mxu0 %v1097
      %1238 = vmatpush1.msra.mxu0 %v1096
      %1239 = vmatprep.subr.mxu0 %v1099
      %1240 = vmatpush1.msra.mxu0 %v1098
      %1241 = vmatprep.subr.mxu0 %v1101
      %1242 = vmatpush1.msra.mxu0 %v1100
      %1243 = vmatprep.subr.mxu0 %v1103
      %1244 = vmatpush1.msra.mxu0 %v1102
      %1245 = vmatprep.subr.mxu0 %v1105
      %1246 = vmatpush1.msra.mxu0 %v1104
      %1247 = vmatprep.subr.mxu0 %v1107
      %1248 = vmatpush1.msra.mxu0 %v1106
      %1249 = vmatprep.subr.mxu0 %v1109
      %1250 = vmatpush1.msra.mxu0 %v1108
      %1251 = vmatprep.subr.mxu0 %v1111
      %1252 = vmatpush1.msra.mxu0 %v1110
      %1253 = vmatprep.mubr.f32.mxu0 %v201
      %1254 = vmatmul.mubr.f32.gmra.mrb[0].mxu0 %v200
      %v1255 = vpop.f32.mrb[0].mxu0
      %v1256 = vadd.f32 %v1179, %v1255
      %v1257 = vpop.f32.mrb[0].mxu0
      %v1258 = vadd.f32 %v1181, %v1257
      %1259 = vmatprep.mubr.f32.mxu0 %v205
      %1260 = vmatmul.mubr.f32.gmra.mrb[0].mxu0 %v204
      %v1261 = vpop.f32.mrb[0].mxu0
      %v1262 = vadd.f32 %v1185, %v1261
      %v1263 = vpop.f32.mrb[0].mxu0
      %v1264 = vadd.f32 %v1187, %v1263
      %1265 = vdwg.mxu0
      %s1266 = scalar_lea.vmem %s2, 64
      %v1267 = vld [vmem:[%s1266] sm:$0xff]
      %v1268 = vld [vmem:[%s1266 + $0x8] sm:$0xff]
      %v1269 = vld [vmem:[%s1266 + $0x10] sm:$0xff]
      %v1270 = vld [vmem:[%s1266 + $0x18] sm:$0xff]
      %v1272 = vsel %vm780, %v1267, 0
      %v1275 = vsel %vm780, %v1268, 0
      %v1278 = vsel %vm780, %v1269, 0
      %v1281 = vsel %vm780, %v1270, 0
      %1283 = vmatprep.subr.mxu0 %v1258
      %1284 = vmatpush1.msra.mxu0 %v1256
      %1285 = vmatprep.subr.mxu0 %v1264
      %1286 = vmatpush1.msra.mxu0 %v1262
      %1287 = vmatprep.subr.mxu0 0.0
      %1288 = vmatpush1.msra.mxu0 0.0
      %1289 = vmatprep.subr.mxu0 0.0
      %1290 = vmatpush1.msra.mxu0 0.0
      %1291 = vmatprep.subr.mxu0 0.0
      %1292 = vmatpush1.msra.mxu0 0.0
      %1293 = vmatprep.subr.mxu0 0.0
      %1294 = vmatpush1.msra.mxu0 0.0
      %1295 = vmatprep.subr.mxu0 0.0
      %1296 = vmatpush1.msra.mxu0 0.0
      %1297 = vmatprep.subr.mxu0 0.0
      %1298 = vmatpush1.msra.mxu0 0.0
      %1299 = vmatprep.subr.mxu0 0.0
      %1300 = vmatpush1.msra.mxu0 0.0
      %1301 = vmatprep.subr.mxu0 0.0
      %1302 = vmatpush1.msra.mxu0 0.0
      %1303 = vmatprep.subr.mxu0 0.0
      %1304 = vmatpush1.msra.mxu0 0.0
      %1305 = vmatprep.subr.mxu0 0.0
      %1306 = vmatpush1.msra.mxu0 0.0
      %1307 = vmatprep.subr.mxu0 0.0
      %1308 = vmatpush1.msra.mxu0 0.0
      %1309 = vmatprep.subr.mxu0 0.0
      %1310 = vmatpush1.msra.mxu0 0.0
      %1311 = vmatprep.subr.mxu0 0.0
      %1312 = vmatpush1.msra.mxu0 0.0
      %1313 = vmatprep.subr.mxu0 0.0
      %1314 = vmatpush1.msra.mxu0 0.0
      %1315 = vmatprep.subr.mxu0 0.0
      %1316 = vmatpush1.msra.mxu0 0.0
      %1317 = vmatprep.subr.mxu0 0.0
      %1318 = vmatpush1.msra.mxu0 0.0
      %1319 = vmatprep.subr.mxu0 0.0
      %1320 = vmatpush1.msra.mxu0 0.0
      %1321 = vmatprep.subr.mxu0 0.0
      %1322 = vmatpush1.msra.mxu0 0.0
      %1323 = vmatprep.subr.mxu0 0.0
      %1324 = vmatpush1.msra.mxu0 0.0
      %1325 = vmatprep.subr.mxu0 0.0
      %1326 = vmatpush1.msra.mxu0 0.0
      %1327 = vmatprep.subr.mxu0 0.0
      %1328 = vmatpush1.msra.mxu0 0.0
      %1329 = vmatprep.subr.mxu0 0.0
      %1330 = vmatpush1.msra.mxu0 0.0
      %1331 = vmatprep.subr.mxu0 0.0
      %1332 = vmatpush1.msra.mxu0 0.0
      %1333 = vmatprep.subr.mxu0 0.0
      %1334 = vmatpush1.msra.mxu0 0.0
      %1335 = vmatprep.subr.mxu0 0.0
      %1336 = vmatpush1.msra.mxu0 0.0
      %1337 = vmatprep.subr.mxu0 0.0
      %1338 = vmatpush1.msra.mxu0 0.0
      %1339 = vmatprep.subr.mxu0 0.0
      %1340 = vmatpush1.msra.mxu0 0.0
      %1341 = vmatprep.subr.mxu0 0.0
      %1342 = vmatpush1.msra.mxu0 0.0
      %1343 = vmatprep.subr.mxu0 0.0
      %1344 = vmatpush1.msra.mxu0 0.0
      %1345 = vmatprep.subr.mxu0 0.0
      %1346 = vmatpush1.msra.mxu0 0.0
      %1347 = vmatprep.mubr.f32.mxu0 0.0
      %1348 = vmatmul.mubr.f32.gmra.mrb[0].mxu0 %v1272
      %v1349 = vpop.f32.mrb[0].mxu0
      %v1350 = vadd.f32 0.0, %v1349
      %v1351 = vpop.f32.mrb[0].mxu0
      %v1352 = vadd.f32 0.0, %v1351
      %1353 = vmatprep.mubr.f32.mxu0 0.0
      %1354 = vmatmul.mubr.f32.gmra.mrb[0].mxu0 %v1275
      %v1355 = vpop.f32.mrb[0].mxu0
      %v1356 = vadd.f32 0.0, %v1355
      %v1357 = vpop.f32.mrb[0].mxu0
      %v1358 = vadd.f32 0.0, %v1357
      %1359 = vmatprep.mubr.f32.mxu0 0.0
      %1360 = vmatmul.mubr.f32.gmra.mrb[0].mxu0 %v1278
      %v1361 = vpop.f32.mrb[0].mxu0
      %v1362 = vadd.f32 0.0, %v1361
      %v1363 = vpop.f32.mrb[0].mxu0
      %v1364 = vadd.f32 0.0, %v1363
      %1365 = vmatprep.mubr.f32.mxu0 0.0
      %1366 = vmatmul.mubr.f32.gmra.mrb[0].mxu0 %v1281
      %v1367 = vpop.f32.mrb[0].mxu0
      %v1368 = vadd.f32 0.0, %v1367
      %v1369 = vpop.f32.mrb[0].mxu0
      %v1370 = vadd.f32 0.0, %v1369
      %1371 = vdwg.mxu0
      %v1372 = vadd.f32 %v961, %v1350
      %v1373 = vadd.f32 %v963, %v1352
      %v1374 = vadd.f32 %v967, %v1356
      %v1375 = vadd.f32 %v969, %v1358
      %v1376 = vadd.f32 %v973, %v1362
      %v1377 = vadd.f32 %v975, %v1364
      %v1378 = vadd.f32 %v979, %v1368
      %v1379 = vadd.f32 %v981, %v1370
      %v1380 = vld [vmem:[%s3] sm:$0xff]
      %v1381 = vld [vmem:[%s3 + $0x8] sm:$0xff]
      %v1382 = vld [vmem:[%s3 + $0x10] sm:$0xff]
      %v1383 = vld [vmem:[%s3 + $0x18] sm:$0xff]
      %v1384 = vld [vmem:[%s3 + $0x20] sm:$0xff]
      %v1385 = vld [vmem:[%s3 + $0x28] sm:$0xff]
      %v1386 = vld [vmem:[%s3 + $0x30] sm:$0xff]
      %v1387 = vld [vmem:[%s3 + $0x38] sm:$0xff]
      %v1388 = vld [vmem:[%s3 + $0x40] sm:$0xff]
      %v1389 = vld [vmem:[%s3 + $0x48] sm:$0xff]
      %v1390 = vld [vmem:[%s3 + $0x50] sm:$0xff]
      %v1391 = vld [vmem:[%s3 + $0x58] sm:$0xff]
      %v1392 = vld [vmem:[%s3 + $0x60] sm:$0xff]
      %v1393 = vld [vmem:[%s3 + $0x68] sm:$0xff]
      %v1394 = vld [vmem:[%s3 + $0x70] sm:$0xff]
      %v1395 = vld [vmem:[%s3 + $0x78] sm:$0xff]
      %v1396 = vld [vmem:[%s3 + $0x80] sm:$0xff]
      %v1397 = vld [vmem:[%s3 + $0x88] sm:$0xff]
      %v1398 = vld [vmem:[%s3 + $0x90] sm:$0xff]
      %v1399 = vld [vmem:[%s3 + $0x98] sm:$0xff]
      %v1400 = vld [vmem:[%s3 + $0xa0] sm:$0xff]
      %v1401 = vld [vmem:[%s3 + $0xa8] sm:$0xff]
      %v1402 = vld [vmem:[%s3 + $0xb0] sm:$0xff]
      %v1403 = vld [vmem:[%s3 + $0xb8] sm:$0xff]
      %v1404 = vld [vmem:[%s3 + $0xc0] sm:$0xff]
      %v1405 = vld [vmem:[%s3 + $0xc8] sm:$0xff]
      %v1406 = vld [vmem:[%s3 + $0xd0] sm:$0xff]
      %v1407 = vld [vmem:[%s3 + $0xd8] sm:$0xff]
      %v1408 = vld [vmem:[%s3 + $0xe0] sm:$0xff]
      %v1409 = vld [vmem:[%s3 + $0xe8] sm:$0xff]
      %v1410 = vld [vmem:[%s3 + $0xf0] sm:$0xff]
      %v1411 = vld [vmem:[%s3 + $0xf8] sm:$0xff]
      %v1412 = vld [vmem:[%s3 + $0x100] sm:$0xff]
      %v1413 = vld [vmem:[%s3 + $0x108] sm:$0xff]
      %v1414 = vld [vmem:[%s3 + $0x110] sm:$0xff]
      %v1415 = vld [vmem:[%s3 + $0x118] sm:$0xff]
      %v1416 = vld [vmem:[%s3 + $0x120] sm:$0xff]
      %v1417 = vld [vmem:[%s3 + $0x128] sm:$0xff]
      %v1418 = vld [vmem:[%s3 + $0x130] sm:$0xff]
      %v1419 = vld [vmem:[%s3 + $0x138] sm:$0xff]
      %v1420 = vld [vmem:[%s3 + $0x140] sm:$0xff]
      %v1421 = vld [vmem:[%s3 + $0x148] sm:$0xff]
      %v1422 = vld [vmem:[%s3 + $0x150] sm:$0xff]
      %v1423 = vld [vmem:[%s3 + $0x158] sm:$0xff]
      %v1424 = vld [vmem:[%s3 + $0x160] sm:$0xff]
      %v1425 = vld [vmem:[%s3 + $0x168] sm:$0xff]
      %v1426 = vld [vmem:[%s3 + $0x170] sm:$0xff]
      %v1427 = vld [vmem:[%s3 + $0x178] sm:$0xff]
      %v1428 = vld [vmem:[%s3 + $0x180] sm:$0xff]
      %v1429 = vld [vmem:[%s3 + $0x188] sm:$0xff]
      %v1430 = vld [vmem:[%s3 + $0x190] sm:$0xff]
      %v1431 = vld [vmem:[%s3 + $0x198] sm:$0xff]
      %v1432 = vld [vmem:[%s3 + $0x1a0] sm:$0xff]
      %v1433 = vld [vmem:[%s3 + $0x1a8] sm:$0xff]
      %v1434 = vld [vmem:[%s3 + $0x1b0] sm:$0xff]
      %v1435 = vld [vmem:[%s3 + $0x1b8] sm:$0xff]
      %v1436 = vld [vmem:[%s3 + $0x1c0] sm:$0xff]
      %v1437 = vld [vmem:[%s3 + $0x1c8] sm:$0xff]
      %v1438 = vld [vmem:[%s3 + $0x1d0] sm:$0xff]
      %v1439 = vld [vmem:[%s3 + $0x1d8] sm:$0xff]
      %v1440 = vld [vmem:[%s3 + $0x1e0] sm:$0xff]
      %v1441 = vld [vmem:[%s3 + $0x1e8] sm:$0xff]
      %v1442 = vld [vmem:[%s3 + $0x1f0] sm:$0xff]
      %v1443 = vld [vmem:[%s3 + $0x1f8] sm:$0xff]
      %v1444 = vld [vmem:[%s3 + $0x200] sm:$0xff]
      %v1445 = vld [vmem:[%s3 + $0x208] sm:$0xff]
      %v1446 = vld [vmem:[%s3 + $0x210] sm:$0xff]
      %v1447 = vld [vmem:[%s3 + $0x218] sm:$0xff]
      %v1448 = vld [vmem:[%s3 + $0x220] sm:$0xff]
      %v1449 = vld [vmem:[%s3 + $0x228] sm:$0xff]
      %v1450 = vld [vmem:[%s3 + $0x230] sm:$0xff]
      %v1451 = vld [vmem:[%s3 + $0x238] sm:$0xff]
      %v1452 = vld [vmem:[%s3 + $0x240] sm:$0xff]
      %v1453 = vld [vmem:[%s3 + $0x248] sm:$0xff]
      %v1454 = vld [vmem:[%s3 + $0x250] sm:$0xff]
      %v1455 = vld [vmem:[%s3 + $0x258] sm:$0xff]
      %v1456 = vld [vmem:[%s3 + $0x260] sm:$0xff]
      %v1457 = vld [vmem:[%s3 + $0x268] sm:$0xff]
      %v1458 = vld [vmem:[%s3 + $0x270] sm:$0xff]
      %v1459 = vld [vmem:[%s3 + $0x278] sm:$0xff]
      %v1460 = vld [vmem:[%s3 + $0x280] sm:$0xff]
      %v1461 = vld [vmem:[%s3 + $0x288] sm:$0xff]
      %v1462 = vld [vmem:[%s3 + $0x290] sm:$0xff]
      %v1463 = vld [vmem:[%s3 + $0x298] sm:$0xff]
      %v1464 = vld [vmem:[%s3 + $0x2a0] sm:$0xff]
      %v1465 = vld [vmem:[%s3 + $0x2a8] sm:$0xff]
      %v1466 = vld [vmem:[%s3 + $0x2b0] sm:$0xff]
      %v1467 = vld [vmem:[%s3 + $0x2b8] sm:$0xff]
      %v1468 = vld [vmem:[%s3 + $0x2c0] sm:$0xff]
      %v1469 = vld [vmem:[%s3 + $0x2c8] sm:$0xff]
      %v1470 = vld [vmem:[%s3 + $0x2d0] sm:$0xff]
      %v1471 = vld [vmem:[%s3 + $0x2d8] sm:$0xff]
      %v1472 = vld [vmem:[%s3 + $0x2e0] sm:$0xff]
      %v1473 = vld [vmem:[%s3 + $0x2e8] sm:$0xff]
      %v1474 = vld [vmem:[%s3 + $0x2f0] sm:$0xff]
      %v1475 = vld [vmem:[%s3 + $0x2f8] sm:$0xff]
      %v1476 = vld [vmem:[%s3 + $0x300] sm:$0xff]
      %v1477 = vld [vmem:[%s3 + $0x308] sm:$0xff]
      %v1478 = vld [vmem:[%s3 + $0x310] sm:$0xff]
      %v1479 = vld [vmem:[%s3 + $0x318] sm:$0xff]
      %v1480 = vld [vmem:[%s3 + $0x320] sm:$0xff]
      %v1481 = vld [vmem:[%s3 + $0x328] sm:$0xff]
      %v1482 = vld [vmem:[%s3 + $0x330] sm:$0xff]
      %v1483 = vld [vmem:[%s3 + $0x338] sm:$0xff]
      %v1484 = vld [vmem:[%s3 + $0x340] sm:$0xff]
      %v1485 = vld [vmem:[%s3 + $0x348] sm:$0xff]
      %v1486 = vld [vmem:[%s3 + $0x350] sm:$0xff]
      %v1487 = vld [vmem:[%s3 + $0x358] sm:$0xff]
      %v1488 = vld [vmem:[%s3 + $0x360] sm:$0xff]
      %v1489 = vld [vmem:[%s3 + $0x368] sm:$0xff]
      %v1490 = vld [vmem:[%s3 + $0x370] sm:$0xff]
      %v1491 = vld [vmem:[%s3 + $0x378] sm:$0xff]
      %v1492 = vld [vmem:[%s3 + $0x380] sm:$0xff]
      %v1493 = vld [vmem:[%s3 + $0x388] sm:$0xff]
      %v1494 = vld [vmem:[%s3 + $0x390] sm:$0xff]
      %v1495 = vld [vmem:[%s3 + $0x398] sm:$0xff]
      %v1496 = vld [vmem:[%s3 + $0x3a0] sm:$0xff]
      %v1497 = vld [vmem:[%s3 + $0x3a8] sm:$0xff]
      %v1498 = vld [vmem:[%s3 + $0x3b0] sm:$0xff]
      %v1499 = vld [vmem:[%s3 + $0x3b8] sm:$0xff]
      %v1500 = vld [vmem:[%s3 + $0x3c0] sm:$0xff]
      %v1501 = vld [vmem:[%s3 + $0x3c8] sm:$0xff]
      %v1502 = vld [vmem:[%s3 + $0x3d0] sm:$0xff]
      %v1503 = vld [vmem:[%s3 + $0x3d8] sm:$0xff]
      %v1504 = vld [vmem:[%s3 + $0x3e0] sm:$0xff]
      %v1505 = vld [vmem:[%s3 + $0x3e8] sm:$0xff]
      %v1506 = vld [vmem:[%s3 + $0x3f0] sm:$0xff]
      %v1507 = vld [vmem:[%s3 + $0x3f8] sm:$0xff]
      %1508 = vmatprep.subr.mxu0 %v1381
      %1509 = vmatpush1.msra.mxu0 %v1380
      %1510 = vmatprep.subr.mxu0 %v1385
      %1511 = vmatpush1.msra.mxu0 %v1384
      %1512 = vmatprep.subr.mxu0 %v1389
      %1513 = vmatpush1.msra.mxu0 %v1388
      %1514 = vmatprep.subr.mxu0 %v1393
      %1515 = vmatpush1.msra.mxu0 %v1392
      %1516 = vmatprep.subr.mxu0 %v1397
      %1517 = vmatpush1.msra.mxu0 %v1396
      %1518 = vmatprep.subr.mxu0 %v1401
      %1519 = vmatpush1.msra.mxu0 %v1400
      %1520 = vmatprep.subr.mxu0 %v1405
      %1521 = vmatpush1.msra.mxu0 %v1404
      %1522 = vmatprep.subr.mxu0 %v1409
      %1523 = vmatpush1.msra.mxu0 %v1408
      %1524 = vmatprep.subr.mxu0 %v1413
      %1525 = vmatpush1.msra.mxu0 %v1412
      %1526 = vmatprep.subr.mxu0 %v1417
      %1527 = vmatpush1.msra.mxu0 %v1416
      %1528 = vmatprep.subr.mxu0 %v1421
      %1529 = vmatpush1.msra.mxu0 %v1420
      %1530 = vmatprep.subr.mxu0 %v1425
      %1531 = vmatpush1.msra.mxu0 %v1424
      %1532 = vmatprep.subr.mxu0 %v1429
      %1533 = vmatpush1.msra.mxu0 %v1428
      %1534 = vmatprep.subr.mxu0 %v1433
      %1535 = vmatpush1.msra.mxu0 %v1432
      %1536 = vmatprep.subr.mxu0 %v1437
      %1537 = vmatpush1.msra.mxu0 %v1436
      %1538 = vmatprep.subr.mxu0 %v1441
      %1539 = vmatpush1.msra.mxu0 %v1440
      %1540 = vmatprep.subr.mxu0 %v1445
      %1541 = vmatpush1.msra.mxu0 %v1444
      %1542 = vmatprep.subr.mxu0 %v1449
      %1543 = vmatpush1.msra.mxu0 %v1448
      %1544 = vmatprep.subr.mxu0 %v1453
      %1545 = vmatpush1.msra.mxu0 %v1452
      %1546 = vmatprep.subr.mxu0 %v1457
      %1547 = vmatpush1.msra.mxu0 %v1456
      %1548 = vmatprep.subr.mxu0 %v1461
      %1549 = vmatpush1.msra.mxu0 %v1460
      %1550 = vmatprep.subr.mxu0 %v1465
      %1551 = vmatpush1.msra.mxu0 %v1464
      %1552 = vmatprep.subr.mxu0 %v1469
      %1553 = vmatpush1.msra.mxu0 %v1468
      %1554 = vmatprep.subr.mxu0 %v1473
      %1555 = vmatpush1.msra.mxu0 %v1472
      %1556 = vmatprep.subr.mxu0 %v1477
      %1557 = vmatpush1.msra.mxu0 %v1476
      %1558 = vmatprep.subr.mxu0 %v1481
      %1559 = vmatpush1.msra.mxu0 %v1480
      %1560 = vmatprep.subr.mxu0 %v1485
      %1561 = vmatpush1.msra.mxu0 %v1484
      %1562 = vmatprep.subr.mxu0 %v1489
      %1563 = vmatpush1.msra.mxu0 %v1488
      %1564 = vmatprep.subr.mxu0 %v1493
      %1565 = vmatpush1.msra.mxu0 %v1492
      %1566 = vmatprep.subr.mxu0 %v1497
      %1567 = vmatpush1.msra.mxu0 %v1496
      %1568 = vmatprep.subr.mxu0 %v1501
      %1569 = vmatpush1.msra.mxu0 %v1500
      %1570 = vmatprep.subr.mxu0 %v1505
      %1571 = vmatpush1.msra.mxu0 %v1504
      %1572 = vmatprep.mubr.f32.mxu0 %v1373
      %1573 = vmatmul.mubr.f32.gmra.mrb[0].mxu0 %v1372
      %v1574 = vpop.f32.mrb[0].mxu0
      %v1575 = vadd.f32 0.0, %v1574
      %v1576 = vpop.f32.mrb[0].mxu0
      %v1577 = vadd.f32 0.0, %v1576
      %1578 = vmatprep.mubr.f32.mxu0 %v1375
      %1579 = vmatmul.mubr.f32.gmra.mrb[0].mxu0 %v1374
      %v1580 = vpop.f32.mrb[0].mxu0
      %v1581 = vadd.f32 0.0, %v1580
      %v1582 = vpop.f32.mrb[0].mxu0
      %v1583 = vadd.f32 0.0, %v1582
      %1584 = vmatprep.mubr.f32.mxu0 %v1377
      %1585 = vmatmul.mubr.f32.gmra.mrb[0].mxu0 %v1376
      %v1586 = vpop.f32.mrb[0].mxu0
      %v1587 = vadd.f32 0.0, %v1586
      %v1588 = vpop.f32.mrb[0].mxu0
      %v1589 = vadd.f32 0.0, %v1588
      %1590 = vmatprep.mubr.f32.mxu0 %v1379
      %1591 = vmatmul.mubr.f32.gmra.mrb[0].mxu0 %v1378
      %v1592 = vpop.f32.mrb[0].mxu0
      %v1593 = vadd.f32 0.0, %v1592
      %v1594 = vpop.f32.mrb[0].mxu0
      %v1595 = vadd.f32 0.0, %v1594
      %1596 = vdwg.mxu0
      %1597 = vmatprep.subr.mxu0 %v1383
      %1598 = vmatpush1.msra.mxu0 %v1382
      %1599 = vmatprep.subr.mxu0 %v1387
      %1600 = vmatpush1.msra.mxu0 %v1386
      %1601 = vmatprep.subr.mxu0 %v1391
      %1602 = vmatpush1.msra.mxu0 %v1390
      %1603 = vmatprep.subr.mxu0 %v1395
      %1604 = vmatpush1.msra.mxu0 %v1394
      %1605 = vmatprep.subr.mxu0 %v1399
      %1606 = vmatpush1.msra.mxu0 %v1398
      %1607 = vmatprep.subr.mxu0 %v1403
      %1608 = vmatpush1.msra.mxu0 %v1402
      %1609 = vmatprep.subr.mxu0 %v1407
      %1610 = vmatpush1.msra.mxu0 %v1406
      %1611 = vmatprep.subr.mxu0 %v1411
      %1612 = vmatpush1.msra.mxu0 %v1410
      %1613 = vmatprep.subr.mxu0 %v1415
      %1614 = vmatpush1.msra.mxu0 %v1414
      %1615 = vmatprep.subr.mxu0 %v1419
      %1616 = vmatpush1.msra.mxu0 %v1418
      %1617 = vmatprep.subr.mxu0 %v1423
      %1618 = vmatpush1.msra.mxu0 %v1422
      %1619 = vmatprep.subr.mxu0 %v1427
      %1620 = vmatpush1.msra.mxu0 %v1426
      %1621 = vmatprep.subr.mxu0 %v1431
      %1622 = vmatpush1.msra.mxu0 %v1430
      %1623 = vmatprep.subr.mxu0 %v1435
      %1624 = vmatpush1.msra.mxu0 %v1434
      %1625 = vmatprep.subr.mxu0 %v1439
      %1626 = vmatpush1.msra.mxu0 %v1438
      %1627 = vmatprep.subr.mxu0 %v1443
      %1628 = vmatpush1.msra.mxu0 %v1442
      %1629 = vmatprep.subr.mxu0 %v1447
      %1630 = vmatpush1.msra.mxu0 %v1446
      %1631 = vmatprep.subr.mxu0 %v1451
      %1632 = vmatpush1.msra.mxu0 %v1450
      %1633 = vmatprep.subr.mxu0 %v1455
      %1634 = vmatpush1.msra.mxu0 %v1454
      %1635 = vmatprep.subr.mxu0 %v1459
      %1636 = vmatpush1.msra.mxu0 %v1458
      %1637 = vmatprep.subr.mxu0 %v1463
      %1638 = vmatpush1.msra.mxu0 %v1462
      %1639 = vmatprep.subr.mxu0 %v1467
      %1640 = vmatpush1.msra.mxu0 %v1466
      %1641 = vmatprep.subr.mxu0 %v1471
      %1642 = vmatpush1.msra.mxu0 %v1470
      %1643 = vmatprep.subr.mxu0 %v1475
      %1644 = vmatpush1.msra.mxu0 %v1474
      %1645 = vmatprep.subr.mxu0 %v1479
      %1646 = vmatpush1.msra.mxu0 %v1478
      %1647 = vmatprep.subr.mxu0 %v1483
      %1648 = vmatpush1.msra.mxu0 %v1482
      %1649 = vmatprep.subr.mxu0 %v1487
      %1650 = vmatpush1.msra.mxu0 %v1486
      %1651 = vmatprep.subr.mxu0 %v1491
      %1652 = vmatpush1.msra.mxu0 %v1490
      %1653 = vmatprep.subr.mxu0 %v1495
      %1654 = vmatpush1.msra.mxu0 %v1494
      %1655 = vmatprep.subr.mxu0 %v1499
      %1656 = vmatpush1.msra.mxu0 %v1498
      %1657 = vmatprep.subr.mxu0 %v1503
      %1658 = vmatpush1.msra.mxu0 %v1502
      %1659 = vmatprep.subr.mxu0 %v1507
      %1660 = vmatpush1.msra.mxu0 %v1506
      %1661 = vmatprep.mubr.f32.mxu0 %v1373
      %1662 = vmatmul.mubr.f32.gmra.mrb[0].mxu0 %v1372
      %v1663 = vpop.f32.mrb[0].mxu0
      %v1664 = vadd.f32 0.0, %v1663
      %v1665 = vpop.f32.mrb[0].mxu0
      %v1666 = vadd.f32 0.0, %v1665
      %1667 = vmatprep.mubr.f32.mxu0 %v1375
      %1668 = vmatmul.mubr.f32.gmra.mrb[0].mxu0 %v1374
      %v1669 = vpop.f32.mrb[0].mxu0
      %v1670 = vadd.f32 0.0, %v1669
      %v1671 = vpop.f32.mrb[0].mxu0
      %v1672 = vadd.f32 0.0, %v1671
      %1673 = vmatprep.mubr.f32.mxu0 %v1377
      %1674 = vmatmul.mubr.f32.gmra.mrb[0].mxu0 %v1376
      %v1675 = vpop.f32.mrb[0].mxu0
      %v1676 = vadd.f32 0.0, %v1675
      %v1677 = vpop.f32.mrb[0].mxu0
      %v1678 = vadd.f32 0.0, %v1677
      %1679 = vmatprep.mubr.f32.mxu0 %v1379
      %1680 = vmatmul.mubr.f32.gmra.mrb[0].mxu0 %v1378
      %v1681 = vpop.f32.mrb[0].mxu0
      %v1682 = vadd.f32 0.0, %v1681
      %v1683 = vpop.f32.mrb[0].mxu0
      %v1684 = vadd.f32 0.0, %v1683
      %1685 = vdwg.mxu0
      %1686 = vst [vmem:[%s197] sm:$0xff] %v1575
      %1687 = vst [vmem:[%s197 + $0x8] sm:$0xff] %v1577
      %1688 = vst [vmem:[%s197 + $0x10] sm:$0xff] %v1664
      %1689 = vst [vmem:[%s197 + $0x18] sm:$0xff] %v1666
      %1690 = vst [vmem:[%s197 + $0x20] sm:$0xff] %v1581
      %1691 = vst [vmem:[%s197 + $0x28] sm:$0xff] %v1583
      %1692 = vst [vmem:[%s197 + $0x30] sm:$0xff] %v1670
      %1693 = vst [vmem:[%s197 + $0x38] sm:$0xff] %v1672
      %1694 = vst [vmem:[%s197 + $0x40] sm:$0xff] %v1587
      %1695 = vst [vmem:[%s197 + $0x48] sm:$0xff] %v1589
      %1696 = vst [vmem:[%s197 + $0x50] sm:$0xff] %v1676
      %1697 = vst [vmem:[%s197 + $0x58] sm:$0xff] %v1678
      %1698 = vst [vmem:[%s197 + $0x60] sm:$0xff] %v1593
      %1699 = vst [vmem:[%s197 + $0x68] sm:$0xff] %v1595
      %1700 = vst [vmem:[%s197 + $0x70] sm:$0xff] %v1682
      %1701 = vst [vmem:[%s197 + $0x78] sm:$0xff] %v1684
      %p1702 = scmp.lt.s32.totalorder %s15, 1
      %s1703 = scalar_select %p1702, %s15, 1
      %s1704 = smul.addr %s1703, 16
      %s1705 = smul.addr %s1704, 8
      %s1706 = scalar_lea.vmem %s4, %s1705
      // Predicated region
      $region37: #{upsample.1} parent=35 // pred_check
        %p1707 = pneg %p122
      $region38: #{upsample.1} parent=35 // pred_check_branch
        %1709 = sbr.rel (%p1707) target = $region40
      $region39: #{upsample.1} parent=35 // pred_region
        _
      $region40: #{upsample.1} parent=35 // pred_fallthru
        _
    $region36: #{upsample.1} parent=5 // pred_fallthru
      _
    %p1710 = scmp.le.s32.totalorder 2, %s10
    // Predicated region
    $region41: #{upsample.1} parent=5 // pred_check
      %p1711 = pneg %p1710
    $region42: #{upsample.1} parent=5 // pred_check_branch
      %1713 = sbr.rel (%p1711) target = $region44
    $region43: #{upsample.1} parent=5 // pred_region
      %s1714 = ssub.s32 %s10, 2
      // Predicated region
      $region45: #{upsample.1} parent=43 // pred_check
        %p1715 = pneg %p128
      $region46: #{upsample.1} parent=43 // pred_check_branch
        %1717 = sbr.rel (%p1715) target = $region48
      $region47: #{upsample.1} parent=43 // pred_region
        %p1718 = scmp.lt.s32.totalorder %s16, 1
        %s1719 = scalar_select %p1718, %s16, 1
        %s1720 = smul.addr %s1719, 16
        %s1721 = smul.addr %s1720, 8
        %s1722 = scalar_lea.vmem %s4, %s1721
      $region48: #{upsample.1} parent=43 // pred_fallthru
        _
    $region44: #{upsample.1} parent=5 // pred_fallthru
      _
  $region6: #{upsample.1} parent=0 // loop_footer
    %s14 = sadd.s32 1, %s10
  $region7: #{upsample.1} parent=0 // loop_footer_branch
    %9 = sbr.rel target = $region3
  $region8: #{upsample.1} parent=0 // loop_exit
    _

</llo_original>
